<compile_context>
chip_gen: v6e
topology: v6e:2x2x1
jax: 0.10.0
libtpu: 0.0.40
codegen_flags: <defaults>
</compile_context>

<pallas_src>
import functools

import jax
import jax.numpy as jnp
from jax.experimental import pallas as pl
from jax.experimental.pallas import tpu as pltpu


# OGB full_bond_feature_dims
BOND_FEATURE_DIMS = (5, 6, 2)

TN = 128       # node tile for the scatter kernel (rows per output block)
TN_LIN = 512   # node tile for the linear pass (memory-bound -> big tiles)
TE = 512       # edge tile (deep MXU contraction, fewer grid steps)
LANE = 128     # lane-dense feature padding

assert TN_LIN % TN == 0


def _round_up(x, m):
    return ((x + m - 1) // m) * m


# --------------------------------------------------------------------------
# Kernel 1: per-node-tile Linear   h = x @ W^T + b
# --------------------------------------------------------------------------
def _linear_kernel(x_ref, wt_ref, b_ref, h_ref):
    h_ref[...] = jnp.dot(x_ref[...], wt_ref[...],
                         preferred_element_type=jnp.float32) + b_ref[...]


def _linear(x_p, wt_p, b_p):
    n_pad, dp = x_p.shape
    grid = (n_pad // TN_LIN,)
    cost = pl.CostEstimate(flops=2 * n_pad * dp * dp,
                           transcendentals=0,
                           bytes_accessed=4 * (2 * n_pad * dp + dp * dp))
    return pl.pallas_call(
        _linear_kernel,
        grid=grid,
        in_specs=[
            pl.BlockSpec((TN_LIN, dp), lambda i: (i, 0)),   # x tile
            pl.BlockSpec((dp, dp), lambda i: (0, 0)),       # W^T (resident)
            pl.BlockSpec((1, dp), lambda i: (0, 0)),        # bias
        ],
        out_specs=pl.BlockSpec((TN_LIN, dp), lambda i: (i, 0)),
        out_shape=jax.ShapeDtypeStruct((n_pad, dp), jnp.float32),
        compiler_params=pltpu.CompilerParams(
            dimension_semantics=("parallel",),
            vmem_limit_bytes=48 * 1024 * 1024),
        cost_estimate=cost,
    )(x_p, wt_p, b_p)


# --------------------------------------------------------------------------
# Kernel 2: per-edge-tile message + scatter-add into destination node blocks.
# Edges are pre-sorted/grouped by destination node block; the output block
# index (blk[t]) is data-dependent via scalar prefetch and acts as the
# accumulator across consecutive edge tiles of the same block.  The first
# edge tile of each block initializes the accumulator with the root term
# relu(h + root) / deg.
# --------------------------------------------------------------------------
def _message_scatter_kernel(blk_ref, flag_ref, h_ref, root_ref, invd_ref,
                            premsg_ref, dstloc_ref, out_ref, rows_ref):
    t = pl.program_id(0)

    # One-hot row indices: generate once, reuse every step (v5e VPU saver).
    @pl.when(t == 0)
    def _():
        rows_ref[...] = jax.lax.broadcasted_iota(jnp.int32, (TN, TE), 0)

    # messages: relu(norm * (h[src] + edge_emb))        [TE, DP] bf16
    msg = jnp.maximum(premsg_ref[...], 0.0)

    # pure 0/1 scatter matrix: oh[v, e] = 1 if local_dst[e] == v else 0
    dl = dstloc_ref[0]                                            # [1, TE] int32
    oh = jnp.where(dl == rows_ref[...], 1.0, 0.0).astype(jnp.bfloat16)

    contrib = jnp.dot(oh, msg, preferred_element_type=jnp.float32)  # [TN, DP] f32

    # first edge tile of this node block: initialize the output accumulator
    # with the root term, then accumulate messages.
    @pl.when(flag_ref[t] == 1)
    def _():
        out_ref[...] = jnp.maximum(h_ref[...] + root_ref[...], 0.0) * invd_ref[...]

    out_ref[...] += contrib


def _message_scatter(block_of_tile, first_flag, h, root_p, inv_degs,
                     pre_msg, dstloc_3d, *, n_pad, dp, num_tiles):
    cost = pl.CostEstimate(
        flops=2 * num_tiles * TN * TE * dp,
        transcendentals=0,
        bytes_accessed=(2 * num_tiles * TE * dp          # bf16 pre_msg
                        + 4 * 2 * n_pad * dp             # h read + out write
                        + 4 * num_tiles * TE))           # dstloc
    return pl.pallas_call(
        _message_scatter_kernel,
        grid_spec=pltpu.PrefetchScalarGridSpec(
            num_scalar_prefetch=2,
            grid=(num_tiles,),
            in_specs=[
                pl.BlockSpec((TN, dp), lambda t, blk, flg: (blk[t], 0)),   # h
                pl.BlockSpec((1, dp), lambda t, blk, flg: (0, 0)),         # root emb
                pl.BlockSpec((TN, 1), lambda t, blk, flg: (blk[t], 0)),    # 1/deg
                pl.BlockSpec((TE, dp), lambda t, blk, flg: (t, 0)),        # pre_msg bf16
                pl.BlockSpec((1, 1, TE), lambda t, blk, flg: (t, 0, 0)),   # local dst
            ],
            out_specs=pl.BlockSpec((TN, dp), lambda t, blk, flg: (blk[t], 0)),
            scratch_shapes=[pltpu.VMEM((TN, TE), jnp.int32)],
        ),
        out_shape=jax.ShapeDtypeStruct((n_pad, dp), jnp.float32),
        compiler_params=pltpu.CompilerParams(
            dimension_semantics=("arbitrary",),
            vmem_limit_bytes=48 * 1024 * 1024),
        cost_estimate=cost,
    )(block_of_tile, first_flag, h, root_p, inv_degs, pre_msg, dstloc_3d)


# --------------------------------------------------------------------------
# Full forward (glue + the two Pallas calls)
# --------------------------------------------------------------------------
@functools.partial(jax.jit, static_argnames=("num_nodes",))
def gcn_conv(params, x, edge_attr, src, dst, num_nodes):
    n, d = x.shape
    e = src.shape[0]
    dp = _round_up(d, LANE)              # lane-dense feature dim
    n_pad = _round_up(num_nodes, TN_LIN)  # multiple of both TN_LIN and TN
    num_blocks = n_pad // TN

    # --- pad params / node features to lane-dense dp ---------------------
    x_p = jnp.zeros((n_pad, dp), jnp.float32).at[:n, :d].set(x)
    wt_p = jnp.zeros((dp, dp), jnp.float32).at[:d, :d].set(params["w"].T)
    b_p = jnp.zeros((1, dp), jnp.float32).at[0, :d].set(params["b"])
    root_p = jnp.zeros((1, dp), jnp.float32).at[:, :d].set(params["root_emb"])

    # --- degrees / symmetric norm ----------------------------------------
    degs = jnp.zeros((n_pad,), jnp.float32).at[src].add(1.0) + 1.0
    norm = degs ** -0.5
    inv_degs = (1.0 / degs)[:, None]                              # [N_pad, 1]

    # --- stage 1: h = x W^T + b -------------------------------------------
    h = _linear(x_p, wt_p, b_p)

    edge_norm = norm[src] * norm[dst]                             # [E], > 0

    # --- sort edges by destination and group into per-node-block tiles ----
    order = jnp.argsort(dst)
    src_s, dst_s = src[order], dst[order]
    enorm_s = edge_norm[order]
    attr_s = edge_attr[order]

    blk_e = dst_s // TN                                           # node block per edge
    counts = jnp.zeros((num_blocks,), jnp.int32).at[blk_e].add(1)
    tiles_per_block = jnp.maximum((counts + TE - 1) // TE, 1)
    tile_start = jnp.cumsum(tiles_per_block) - tiles_per_block    # exclusive cumsum
    block_start_edge = jnp.cumsum(counts) - counts
    rank = jnp.arange(e, dtype=jnp.int32) - block_start_edge[blk_e]
    slot = tile_start[blk_e] * TE + rank                          # slot in padded edge array

    num_tiles = (e + TE - 1) // TE + num_blocks                   # static upper bound
    s_tot = num_tiles * TE

    # --- scatter only small per-edge scalars into slot order --------------
    src_slot = jnp.zeros((s_tot,), jnp.int32).at[slot].set(src_s.astype(jnp.int32))
    enorm_slot = jnp.zeros((s_tot,), jnp.float32).at[slot].set(enorm_s)
    attr_slot = jnp.zeros((s_tot, edge_attr.shape[1]), jnp.int32
                          ).at[slot].set(attr_s.astype(jnp.int32))
    dstloc_slot = jnp.zeros((s_tot,), jnp.int32).at[slot].set(
        (dst_s - blk_e * TN).astype(jnp.int32))

    # --- bond encoder directly in slot order (tables are tiny; glue) ------
    eemb = jnp.zeros((s_tot, dp), jnp.float32)
    for i, tbl in enumerate(params["bond_tables"]):
        tbl_p = jnp.zeros((tbl.shape[0], dp), jnp.float32).at[:, :d].set(tbl)
        eemb = eemb + jnp.take(tbl_p, attr_slot[:, i], axis=0)

    # --- feature-sized data touched once: gather h rows, fold norm, bf16 --
    # edge_norm > 0 so norm*relu(z) == relu(norm*z); padded slots have
    # enorm_slot == 0 so their pre_msg rows are exactly zero.
    pre_msg = (enorm_slot[:, None]
               * (jnp.take(h, src_slot, axis=0) + eemb)).astype(jnp.bfloat16)

    t_idx = jnp.arange(num_tiles, dtype=jnp.int32)
    block_of_tile = (jnp.searchsorted(tile_start, t_idx, side="right") - 1
                     ).astype(jnp.int32)
    first_flag = jnp.zeros((num_tiles,), jnp.int32).at[tile_start].set(1)

    out_p = _message_scatter(
        block_of_tile, first_flag, h, root_p, inv_degs,
        pre_msg, dstloc_slot.reshape(num_tiles, 1, TE),
        n_pad=n_pad, dp=dp, num_tiles=num_tiles)

    return out_p[:num_nodes, :d]


# --------------------------------------------------------------------------
# Pure-JAX reference mirroring the PyTorch/DGL forward
# --------------------------------------------------------------------------
def reference(params, x, edge_attr, src, dst, num_nodes):
    h = x @ params["w"].T + params["b"]
    e = src.shape[0]
    d = h.shape[1]
    edge_emb = jnp.zeros((e, d), jnp.float32)
    for i, tbl in enumerate(params["bond_tables"]):
        edge_emb = edge_emb + jnp.take(tbl, edge_attr[:, i], axis=0)
    degs = jnp.zeros((num_nodes,), jnp.float32).at[src].add(1.0) + 1.0
    norm = degs ** -0.5
    m = (norm[src] * norm[dst])[:, None] * jax.nn.relu(h[src] + edge_emb)
    new_x = jnp.zeros_like(h).at[dst].add(m)
    return new_x + jax.nn.relu(h + params["root_emb"]) / degs[:, None]


def xavier_uniform(key, shape):
    fan_out, fan_in = shape[0], shape[-1]
    limit = jnp.sqrt(6.0 / (fan_in + fan_out))
    return jax.random.uniform(key, shape, jnp.float32, -limit, limit)


if __name__ == "__main__":
    key = jax.random.PRNGKey(0)
    N, D, E = 16, 32, 40  # nodes, emb_dim, edges

    k = jax.random.split(key, 8)
    params = {
        "w": xavier_uniform(k[0], (D, D)),                # nn.Linear weight [out, in]
        "b": jnp.zeros((D,), jnp.float32),
        "root_emb": jax.random.normal(k[1], (1, D), jnp.float32),
        "bond_tables": [xavier_uniform(k[2 + i], (dim, D))
                        for i, dim in enumerate(BOND_FEATURE_DIMS)],
    }

    x = jax.random.normal(k[5], (N, D), jnp.float32)
    src = jax.random.randint(k[6], (E,), 0, N)
    dst = jax.random.randint(k[7], (E,), 0, N)
    edge_attr = jnp.stack(
        [jax.random.randint(jax.random.fold_in(key, 100 + i), (E,), 0, dim)
         for i, dim in enumerate(BOND_FEATURE_DIMS)], axis=1)

    out = gcn_conv(params, x, edge_attr, src, dst, N)
    out = jax.block_until_ready(out)

    ref = reference(params, x, edge_attr, src, dst, N)
    assert out.shape == (N, D)
    # bf16 message path with f32 accumulation -> relaxed tolerance
    assert jnp.allclose(out, ref, atol=2e-2, rtol=2e-2), "mismatch vs reference"

    print("KERNEL_OK")
</pallas_src>

<mosaic_0001>
module attributes {stable_mosaic.version = 11 : i64} {
  func.func private @main(%arg0: i32) attributes {dimension_semantics = [#tpu.dimension_semantics<core_parallel>], iteration_bounds = array<i64: 2>, tpu.core_type = #tpu.core_type<sc_scalar_subcore>, window_params = []} {
    return
  }
}

module attributes {stable_mosaic.version = 11 : i64} {
  func.func private @main(%arg0: i32) attributes {dimension_semantics = [#tpu.dimension_semantics<core_parallel>], iteration_bounds = array<i64: 2>, tpu.core_type = #tpu.core_type<sc_scalar_subcore>, window_params = []} {
    return
  }
}

module attributes {stable_mosaic.version = 11 : i64} {
  func.func @_linear_kernel(%arg0: i32, %arg1: memref<512x128xf32, #tpu.memory_space<vmem>>, %arg2: memref<128x128xf32, #tpu.memory_space<vmem>>, %arg3: memref<1x128xf32, #tpu.memory_space<vmem>>, %arg4: memref<512x128xf32, #tpu.memory_space<vmem>>) attributes {dimension_semantics = [#tpu.dimension_semantics<parallel>], iteration_bounds = array<i64: 1>, scalar_prefetch = 0 : i64, scratch_operands = 0 : i64, tpu.core_type = #tpu.core_type<tc>, window_params = [{transform_indices = @transform_0, window_bounds = array<i64: 512, 128>}, {pipeline_mode = #tpu.pipeline_mode<synchronous>, transform_indices = @transform_1, window_bounds = array<i64: 128, 128>}, {pipeline_mode = #tpu.pipeline_mode<synchronous>, transform_indices = @transform_2, window_bounds = array<i64: 1, 128>}, {transform_indices = @transform_3, window_bounds = array<i64: 512, 128>}]} {
    %c0 = arith.constant 0 : index
    %c0_0 = arith.constant 0 : index
    %0 = vector.load %arg1[%c0, %c0_0] : memref<512x128xf32, #tpu.memory_space<vmem>>, vector<512x128xf32>
    %c0_1 = arith.constant 0 : index
    %c0_2 = arith.constant 0 : index
    %1 = vector.load %arg2[%c0_1, %c0_2] : memref<128x128xf32, #tpu.memory_space<vmem>>, vector<128x128xf32>
    %cst = arith.constant dense<0.000000e+00> : vector<512x128xf32>
    %2 = tpu.matmul %0, %1, %cst {dimension_numbers = #tpu.dot_dimension_numbers<[1], [0], [0], [1], [0, 0, 1, 1], [], []>} : vector<512x128xf32>, vector<128x128xf32>, vector<512x128xf32> -> vector<512x128xf32>
    %c0_3 = arith.constant 0 : index
    %c0_4 = arith.constant 0 : index
    %3 = vector.load %arg3[%c0_3, %c0_4] : memref<1x128xf32, #tpu.memory_space<vmem>>, vector<1x128xf32>
    %4 = vector.broadcast %3 : vector<1x128xf32> to vector<512x128xf32>
    %5 = arith.addf %2, %4 : vector<512x128xf32>
    %c0_5 = arith.constant 0 : index
    %c0_6 = arith.constant 0 : index
    %6 = vector.load %arg4[%c0_5, %c0_6] : memref<512x128xf32, #tpu.memory_space<vmem>>, vector<512x128xf32>
    tpu.vector_store %arg4[%c0_5, %c0_6], %5 {strides = array<i32>} : memref<512x128xf32, #tpu.memory_space<vmem>>, vector<512x128xf32>,
    return
  }
  func.func @transform_0(%arg0: i32) -> (i32, i32) {
    %c0_i32 = arith.constant 0 : i32
    %c0_i32_0 = arith.constant 0 : i32
    return %arg0, %c0_i32 : i32, i32
  }
  func.func @transform_1(%arg0: i32) -> (i32, i32) {
    %c0_i32 = arith.constant 0 : i32
    %c0_i32_0 = arith.constant 0 : i32
    %c0_i32_1 = arith.constant 0 : i32
    return %c0_i32, %c0_i32_0 : i32, i32
  }
  func.func @transform_2(%arg0: i32) -> (i32, i32) {
    %c0_i32 = arith.constant 0 : i32
    %c0_i32_0 = arith.constant 0 : i32
    %c0_i32_1 = arith.constant 0 : i32
    return %c0_i32, %c0_i32_0 : i32, i32
  }
  func.func @transform_3(%arg0: i32) -> (i32, i32) {
    %c0_i32 = arith.constant 0 : i32
    %c0_i32_0 = arith.constant 0 : i32
    return %arg0, %c0_i32 : i32, i32
  }
}

module attributes {stable_mosaic.version = 11 : i64} {
  func.func @_message_scatter_kernel(%arg0: i32, %arg1: memref<5xi32, #tpu.memory_space<smem>>, %arg2: memref<5xi32, #tpu.memory_space<smem>>, %arg3: memref<128x128xf32, #tpu.memory_space<vmem>>, %arg4: memref<1x128xf32, #tpu.memory_space<vmem>>, %arg5: memref<128x1xf32, #tpu.memory_space<vmem>>, %arg6: memref<512x128xbf16, #tpu.memory_space<vmem>>, %arg7: memref<1x1x512xi32, #tpu.memory_space<vmem>>, %arg8: memref<128x128xf32, #tpu.memory_space<vmem>>, %arg9: memref<128x512xi32, #tpu.memory_space<vmem>>) attributes {dimension_semantics = [#tpu.dimension_semantics<arbitrary>], iteration_bounds = array<i64: 5>, scalar_prefetch = 2 : i64, scratch_operands = 1 : i64, tpu.core_type = #tpu.core_type<tc>, window_params = [{transform_indices = @transform_0, window_bounds = array<i64: 128, 128>}, {pipeline_mode = #tpu.pipeline_mode<synchronous>, transform_indices = @transform_1, window_bounds = array<i64: 1, 128>}, {transform_indices = @transform_2, window_bounds = array<i64: 128, 1>}, {transform_indices = @transform_3, window_bounds = array<i64: 512, 128>}, {transform_indices = @transform_4, window_bounds = array<i64: 1, 1, 512>}, {transform_indices = @transform_5, window_bounds = array<i64: 128, 128>}]} {
    %c0_i32 = arith.constant 0 : i32
    %0 = arith.cmpi eq, %arg0, %c0_i32 : i32
    %1 = arith.extui %0 : i1 to i32
    %c0_i32_0 = arith.constant 0 : i32
    %2 = arith.cmpi ne, %1, %c0_i32_0 : i32
    scf.if %2 {
      %24 = tpu.iota {dimensions = array<i32: 0>} : vector<128x512xi32>
      %c0_15 = arith.constant 0 : index
      %c0_16 = arith.constant 0 : index
      %25 = vector.load %arg9[%c0_15, %c0_16] : memref<128x512xi32, #tpu.memory_space<vmem>>, vector<128x512xi32>
      tpu.vector_store %arg9[%c0_15, %c0_16], %24 {strides = array<i32>} : memref<128x512xi32, #tpu.memory_space<vmem>>, vector<128x512xi32>,
    } else {
    }
    %c0 = arith.constant 0 : index
    %c0_1 = arith.constant 0 : index
    %3 = vector.load %arg6[%c0, %c0_1] : memref<512x128xbf16, #tpu.memory_space<vmem>>, vector<512x128xbf16>
    %cst = arith.constant 0.000000e+00 : bf16
    %4 = vector.broadcast %cst : bf16 to vector<512x128xbf16>
    %5 = arith.maximumf %3, %4 : vector<512x128xbf16>
    %c0_2 = arith.constant 0 : index
    %c0_3 = arith.constant 0 : index
    %c0_4 = arith.constant 0 : index
    %6 = vector.load %arg7[%c0_2, %c0_3, %c0_4] : memref<1x1x512xi32, #tpu.memory_space<vmem>>, vector<1x1x512xi32>
    %7 = vector.shape_cast %6 : vector<1x1x512xi32> to vector<1x512xi32>
    %c0_5 = arith.constant 0 : index
    %c0_6 = arith.constant 0 : index
    %8 = vector.load %arg9[%c0_5, %c0_6] : memref<128x512xi32, #tpu.memory_space<vmem>>, vector<128x512xi32>
    %9 = vector.broadcast %7 : vector<1x512xi32> to vector<128x512xi32>
    %10 = arith.cmpi eq, %9, %8 : vector<128x512xi32>
    %cst_7 = arith.constant 1.000000e+00 : f32
    %cst_8 = arith.constant 0.000000e+00 : f32
    %11 = vector.broadcast %cst_7 : f32 to vector<128x512xf32>
    %12 = vector.broadcast %cst_8 : f32 to vector<128x512xf32>
    %13 = arith.select %10, %11, %12 : vector<128x512xi1>, vector<128x512xf32>
    %14 = arith.truncf %13 : vector<128x512xf32> to vector<128x512xbf16>
    %cst_9 = arith.constant dense<0.000000e+00> : vector<128x128xf32>
    %15 = tpu.matmul %14, %5, %cst_9 {dimension_numbers = #tpu.dot_dimension_numbers<[1], [0], [0], [1], [0, 0, 1, 1], [], []>} : vector<128x512xbf16>, vector<512x128xbf16>, vector<128x128xf32> -> vector<128x128xf32>
    %16 = arith.index_cast %arg0 : i32 to index
    %17 = memref.load %arg2[%16] : memref<5xi32, #tpu.memory_space<smem>>
    %c1_i32 = arith.constant 1 : i32
    %18 = arith.cmpi eq, %17, %c1_i32 : i32
    %19 = arith.extui %18 : i1 to i32
    %c0_i32_10 = arith.constant 0 : i32
    %20 = arith.cmpi ne, %19, %c0_i32_10 : i32
    scf.if %20 {
      %c0_15 = arith.constant 0 : index
      %c0_16 = arith.constant 0 : index
      %24 = vector.load %arg3[%c0_15, %c0_16] : memref<128x128xf32, #tpu.memory_space<vmem>>, vector<128x128xf32>
      %c0_17 = arith.constant 0 : index
      %c0_18 = arith.constant 0 : index
      %25 = vector.load %arg4[%c0_17, %c0_18] : memref<1x128xf32, #tpu.memory_space<vmem>>, vector<1x128xf32>
      %26 = vector.broadcast %25 : vector<1x128xf32> to vector<128x128xf32>
      %27 = arith.addf %24, %26 : vector<128x128xf32>
      %cst_19 = arith.constant 0.000000e+00 : f32
      %28 = vector.broadcast %cst_19 : f32 to vector<128x128xf32>
      %29 = arith.maximumf %27, %28 : vector<128x128xf32>
      %c0_20 = arith.constant 0 : index
      %c0_21 = arith.constant 0 : index
      %30 = vector.load %arg5[%c0_20, %c0_21] : memref<128x1xf32, #tpu.memory_space<vmem>>, vector<128x1xf32>
      %31 = vector.broadcast %30 : vector<128x1xf32> to vector<128x128xf32>
      %32 = arith.mulf %29, %31 : vector<128x128xf32>
      %c0_22 = arith.constant 0 : index
      %c0_23 = arith.constant 0 : index
      %33 = vector.load %arg8[%c0_22, %c0_23] : memref<128x128xf32, #tpu.memory_space<vmem>>, vector<128x128xf32>
      tpu.vector_store %arg8[%c0_22, %c0_23], %32 {strides = array<i32>} : memref<128x128xf32, #tpu.memory_space<vmem>>, vector<128x128xf32>,
    } else {
    }
    %c0_11 = arith.constant 0 : index
    %c0_12 = arith.constant 0 : index
    %21 = vector.load %arg8[%c0_11, %c0_12] : memref<128x128xf32, #tpu.memory_space<vmem>>, vector<128x128xf32>
    %22 = arith.addf %21, %15 : vector<128x128xf32>
    %c0_13 = arith.constant 0 : index
    %c0_14 = arith.constant 0 : index
    %23 = vector.load %arg8[%c0_13, %c0_14] : memref<128x128xf32, #tpu.memory_space<vmem>>, vector<128x128xf32>
    tpu.vector_store %arg8[%c0_13, %c0_14], %22 {strides = array<i32>} : memref<128x128xf32, #tpu.memory_space<vmem>>, vector<128x128xf32>,
    return
  }
  func.func @transform_0(%arg0: i32, %arg1: memref<5xi32, #tpu.memory_space<smem>>, %arg2: memref<5xi32, #tpu.memory_space<smem>>) -> (i32, i32) {
    %0 = arith.index_cast %arg0 : i32 to index
    %1 = memref.load %arg1[%0] : memref<5xi32, #tpu.memory_space<smem>>
    %c0_i32 = arith.constant 0 : i32
    %c0_i32_0 = arith.constant 0 : i32
    return %1, %c0_i32 : i32, i32
  }
  func.func @transform_1(%arg0: i32, %arg1: memref<5xi32, #tpu.memory_space<smem>>, %arg2: memref<5xi32, #tpu.memory_space<smem>>) -> (i32, i32) {
    %c0_i32 = arith.constant 0 : i32
    %c0_i32_0 = arith.constant 0 : i32
    %c0_i32_1 = arith.constant 0 : i32
    return %c0_i32, %c0_i32_0 : i32, i32
  }
  func.func @transform_2(%arg0: i32, %arg1: memref<5xi32, #tpu.memory_space<smem>>, %arg2: memref<5xi32, #tpu.memory_space<smem>>) -> (i32, i32) {
    %0 = arith.index_cast %arg0 : i32 to index
    %1 = memref.load %arg1[%0] : memref<5xi32, #tpu.memory_space<smem>>
    %c0_i32 = arith.constant 0 : i32
    %c0_i32_0 = arith.constant 0 : i32
    return %1, %c0_i32 : i32, i32
  }
  func.func @transform_3(%arg0: i32, %arg1: memref<5xi32, #tpu.memory_space<smem>>, %arg2: memref<5xi32, #tpu.memory_space<smem>>) -> (i32, i32) {
    %c0_i32 = arith.constant 0 : i32
    %c0_i32_0 = arith.constant 0 : i32
    return %arg0, %c0_i32 : i32, i32
  }
  func.func @transform_4(%arg0: i32, %arg1: memref<5xi32, #tpu.memory_space<smem>>, %arg2: memref<5xi32, #tpu.memory_space<smem>>) -> (i32, i32, i32) {
    %c0_i32 = arith.constant 0 : i32
    %c0_i32_0 = arith.constant 0 : i32
    %c0_i32_1 = arith.constant 0 : i32
    return %arg0, %c0_i32, %c0_i32_0 : i32, i32, i32
  }
  func.func @transform_5(%arg0: i32, %arg1: memref<5xi32, #tpu.memory_space<smem>>, %arg2: memref<5xi32, #tpu.memory_space<smem>>) -> (i32, i32) {
    %0 = arith.index_cast %arg0 : i32 to index
    %1 = memref.load %arg1[%0] : memref<5xi32, #tpu.memory_space<smem>>
    %c0_i32 = arith.constant 0 : i32
    %c0_i32_0 = arith.constant 0 : i32
    return %1, %c0_i32 : i32, i32
  }
}

</mosaic_0001>

<llo_original>
// kernel: custom-call.1
$region0: #{custom-call.1}
  %s0 = inlined_call_operand.vmem [shape: u32[5], index: 0, kind: output, shape index: {}]

// kernel: gcn_conv.2
$region0: #{gcn_conv.2}
  #allocation0 [shape = 'u32[]', space=smem, size = 0x4, offset = 0x4, fixed_abs, tag = 'smem constant byte address 0x4 - core index']
  #allocation1 [shape = 'u32[144,128]{1,0:T(1,128)}', space=vmem, size = 0x12000, scoped, tag = 'internal scratch']
  %s0 = inlined_call_operand.vmem [shape: f32[512,128], index: 0, kind: input, shape index: {}]
  %s1 = inlined_call_operand.vmem [shape: f32[128,128], index: 1, kind: input, shape index: {}]
  %s2 = inlined_call_operand.vmem [shape: f32[1,128], index: 2, kind: input, shape index: {}]
  %s3 = inlined_call_operand.vmem [shape: f32[512,128], index: 3, kind: output, shape index: {}]
  %s4 = sld [smem:[#allocation0]]
  $region22: #{gcn_conv.2} parent=0
    _
  %s6 = ssub.s32 1, %s4
  %s7 = scalar_select 0, %s6, %s4
  // Predicated region
  $region2: #{gcn_conv.2} parent=0 // pred_check
    _
  $region3: #{gcn_conv.2} parent=0 // pred_check_branch
    %9 = sbr.rel (0) target = $region5
  $region4: #{gcn_conv.2} parent=0 // pred_region
    _
  $region5: #{gcn_conv.2} parent=0 // pred_fallthru
    _
  // Predicated region
  $region6: #{gcn_conv.2} parent=0 // pred_check
    _
  $region7: #{gcn_conv.2} parent=0 // pred_check_branch
    %11 = sbr.rel (0) target = $region9
  $region8: #{gcn_conv.2} parent=0 // pred_region
    _
  $region9: #{gcn_conv.2} parent=0 // pred_fallthru
    _
  // Predicated region
  $region10: #{gcn_conv.2} parent=0 // pred_check
    _
  $region11: #{gcn_conv.2} parent=0 // pred_check_branch
    %13 = sbr.rel (0) target = $region13
  $region12: #{gcn_conv.2} parent=0 // pred_region
    _
  $region13: #{gcn_conv.2} parent=0 // pred_fallthru
    _
  %v14 = vld [vmem:[%s0] sm:$0xff]
  %v15 = vld [vmem:[%s0 + $0x8] sm:$0xff]
  %v16 = vld [vmem:[%s0 + $0x10] sm:$0xff]
  %v17 = vld [vmem:[%s0 + $0x18] sm:$0xff]
  %v18 = vld [vmem:[%s0 + $0x20] sm:$0xff]
  %v19 = vld [vmem:[%s0 + $0x28] sm:$0xff]
  %v20 = vld [vmem:[%s0 + $0x30] sm:$0xff]
  %v21 = vld [vmem:[%s0 + $0x38] sm:$0xff]
  %v22 = vld [vmem:[%s0 + $0x40] sm:$0xff]
  %v23 = vld [vmem:[%s0 + $0x48] sm:$0xff]
  %v24 = vld [vmem:[%s0 + $0x50] sm:$0xff]
  %v25 = vld [vmem:[%s0 + $0x58] sm:$0xff]
  %v26 = vld [vmem:[%s0 + $0x60] sm:$0xff]
  %v27 = vld [vmem:[%s0 + $0x68] sm:$0xff]
  %v28 = vld [vmem:[%s0 + $0x70] sm:$0xff]
  %v29 = vld [vmem:[%s0 + $0x78] sm:$0xff]
  %v30 = vld [vmem:[%s0 + $0x80] sm:$0xff]
  %v31 = vld [vmem:[%s0 + $0x88] sm:$0xff]
  %v32 = vld [vmem:[%s0 + $0x90] sm:$0xff]
  %v33 = vld [vmem:[%s0 + $0x98] sm:$0xff]
  %v34 = vld [vmem:[%s0 + $0xa0] sm:$0xff]
  %v35 = vld [vmem:[%s0 + $0xa8] sm:$0xff]
  %v36 = vld [vmem:[%s0 + $0xb0] sm:$0xff]
  %v37 = vld [vmem:[%s0 + $0xb8] sm:$0xff]
  %v38 = vld [vmem:[%s0 + $0xc0] sm:$0xff]
  %v39 = vld [vmem:[%s0 + $0xc8] sm:$0xff]
  %v40 = vld [vmem:[%s0 + $0xd0] sm:$0xff]
  %v41 = vld [vmem:[%s0 + $0xd8] sm:$0xff]
  %v42 = vld [vmem:[%s0 + $0xe0] sm:$0xff]
  %v43 = vld [vmem:[%s0 + $0xe8] sm:$0xff]
  %v44 = vld [vmem:[%s0 + $0xf0] sm:$0xff]
  %v45 = vld [vmem:[%s0 + $0xf8] sm:$0xff]
  %v46 = vld [vmem:[%s0 + $0x100] sm:$0xff]
  %v47 = vld [vmem:[%s0 + $0x108] sm:$0xff]
  %v48 = vld [vmem:[%s0 + $0x110] sm:$0xff]
  %v49 = vld [vmem:[%s0 + $0x118] sm:$0xff]
  %v50 = vld [vmem:[%s0 + $0x120] sm:$0xff]
  %v51 = vld [vmem:[%s0 + $0x128] sm:$0xff]
  %v52 = vld [vmem:[%s0 + $0x130] sm:$0xff]
  %v53 = vld [vmem:[%s0 + $0x138] sm:$0xff]
  %v54 = vld [vmem:[%s0 + $0x140] sm:$0xff]
  %v55 = vld [vmem:[%s0 + $0x148] sm:$0xff]
  %v56 = vld [vmem:[%s0 + $0x150] sm:$0xff]
  %v57 = vld [vmem:[%s0 + $0x158] sm:$0xff]
  %v58 = vld [vmem:[%s0 + $0x160] sm:$0xff]
  %v59 = vld [vmem:[%s0 + $0x168] sm:$0xff]
  %v60 = vld [vmem:[%s0 + $0x170] sm:$0xff]
  %v61 = vld [vmem:[%s0 + $0x178] sm:$0xff]
  %v62 = vld [vmem:[%s0 + $0x180] sm:$0xff]
  %v63 = vld [vmem:[%s0 + $0x188] sm:$0xff]
  %v64 = vld [vmem:[%s0 + $0x190] sm:$0xff]
  %v65 = vld [vmem:[%s0 + $0x198] sm:$0xff]
  %v66 = vld [vmem:[%s0 + $0x1a0] sm:$0xff]
  %v67 = vld [vmem:[%s0 + $0x1a8] sm:$0xff]
  %v68 = vld [vmem:[%s0 + $0x1b0] sm:$0xff]
  %v69 = vld [vmem:[%s0 + $0x1b8] sm:$0xff]
  %v70 = vld [vmem:[%s0 + $0x1c0] sm:$0xff]
  %v71 = vld [vmem:[%s0 + $0x1c8] sm:$0xff]
  %v72 = vld [vmem:[%s0 + $0x1d0] sm:$0xff]
  %v73 = vld [vmem:[%s0 + $0x1d8] sm:$0xff]
  %v74 = vld [vmem:[%s0 + $0x1e0] sm:$0xff]
  %v75 = vld [vmem:[%s0 + $0x1e8] sm:$0xff]
  %v76 = vld [vmem:[%s0 + $0x1f0] sm:$0xff]
  %v77 = vld [vmem:[%s0 + $0x1f8] sm:$0xff]
  %v78 = vld [vmem:[%s1] sm:$0xff]
  %v79 = vld [vmem:[%s1 + $0x8] sm:$0xff]
  %v80 = vld [vmem:[%s1 + $0x10] sm:$0xff]
  %v81 = vld [vmem:[%s1 + $0x18] sm:$0xff]
  %v82 = vld [vmem:[%s1 + $0x20] sm:$0xff]
  %v83 = vld [vmem:[%s1 + $0x28] sm:$0xff]
  %v84 = vld [vmem:[%s1 + $0x30] sm:$0xff]
  %v85 = vld [vmem:[%s1 + $0x38] sm:$0xff]
  %v86 = vld [vmem:[%s1 + $0x40] sm:$0xff]
  %v87 = vld [vmem:[%s1 + $0x48] sm:$0xff]
  %v88 = vld [vmem:[%s1 + $0x50] sm:$0xff]
  %v89 = vld [vmem:[%s1 + $0x58] sm:$0xff]
  %v90 = vld [vmem:[%s1 + $0x60] sm:$0xff]
  %v91 = vld [vmem:[%s1 + $0x68] sm:$0xff]
  %v92 = vld [vmem:[%s1 + $0x70] sm:$0xff]
  %v93 = vld [vmem:[%s1 + $0x78] sm:$0xff]
  %v94 = vld [vmem:[%s2] sm:$0x1]
  %v96 = vlaneseq
  %v97 = vshrl.u32 %v96, 7
  %v98 = vsub.s32 0, %v97
  %v99 = vrot.slane %v94, %v98
  %101 = vmatprep.subr.mxu0 0.0
  %102 = vmatpush1.msra.mxu0 %v93
  %103 = vmatprep.subr.mxu0 0.0
  %104 = vmatpush1.msra.mxu0 %v92
  %105 = vmatprep.subr.mxu0 0.0
  %106 = vmatpush1.msra.mxu0 %v91
  %107 = vmatprep.subr.mxu0 0.0
  %108 = vmatpush1.msra.mxu0 %v90
  %109 = vmatprep.subr.mxu0 0.0
  %110 = vmatpush1.msra.mxu0 %v89
  %111 = vmatprep.subr.mxu0 0.0
  %112 = vmatpush1.msra.mxu0 %v88
  %113 = vmatprep.subr.mxu0 0.0
  %114 = vmatpush1.msra.mxu0 %v87
  %115 = vmatprep.subr.mxu0 0.0
  %116 = vmatpush1.msra.mxu0 %v86
  %117 = vmatprep.subr.mxu0 0.0
  %118 = vmatpush1.msra.mxu0 %v85
  %119 = vmatprep.subr.mxu0 0.0
  %120 = vmatpush1.msra.mxu0 %v84
  %121 = vmatprep.subr.mxu0 0.0
  %122 = vmatpush1.msra.mxu0 %v83
  %123 = vmatprep.subr.mxu0 0.0
  %124 = vmatpush1.msra.mxu0 %v82
  %125 = vmatprep.subr.mxu0 0.0
  %126 = vmatpush1.msra.mxu0 %v81
  %127 = vmatprep.subr.mxu0 0.0
  %128 = vmatpush1.msra.mxu0 %v80
  %129 = vmatprep.subr.mxu0 0.0
  %130 = vmatpush1.msra.mxu0 %v79
  %131 = vmatprep.subr.mxu0 0.0
  %132 = vmatpush1.msra.mxu0 %v78
  %133 = vmatprep.subr.mxu0 0.0
  %134 = vmatpush2.msra.mxu0 0.0
  %135 = vmatprep.subr.mxu0 0.0
  %136 = vmatpush2.msra.mxu0 0.0
  %137 = vmatprep.subr.mxu0 0.0
  %138 = vmatpush2.msra.mxu0 0.0
  %139 = vmatprep.subr.mxu0 0.0
  %140 = vmatpush2.msra.mxu0 0.0
  %141 = vmatprep.subr.mxu0 0.0
  %142 = vmatpush2.msra.mxu0 0.0
  %143 = vmatprep.subr.mxu0 0.0
  %144 = vmatpush2.msra.mxu0 0.0
  %145 = vmatprep.subr.mxu0 0.0
  %146 = vmatpush2.msra.mxu0 0.0
  %147 = vmatprep.subr.mxu0 0.0
  %148 = vmatpush2.msra.mxu0 0.0
  %149 = vmatprep.subr.mxu0 0.0
  %150 = vmatpush2.msra.mxu0 0.0
  %151 = vmatprep.subr.mxu0 0.0
  %152 = vmatpush2.msra.mxu0 0.0
  %153 = vmatprep.subr.mxu0 0.0
  %154 = vmatpush2.msra.mxu0 0.0
  %155 = vmatprep.subr.mxu0 0.0
  %156 = vmatpush2.msra.mxu0 0.0
  %157 = vmatprep.subr.mxu0 0.0
  %158 = vmatpush2.msra.mxu0 0.0
  %159 = vmatprep.subr.mxu0 0.0
  %160 = vmatpush2.msra.mxu0 0.0
  %161 = vmatprep.subr.mxu0 0.0
  %162 = vmatpush2.msra.mxu0 0.0
  %163 = vmatprep.subr.mxu0 0.0
  %164 = vmatpush2.msra.mxu0 0.0
  %165 = vmatprep.mubr.f32.mxu0 0.0
  %166 = vmatmul.mubr.f32.gmra.mxu0 %v14
  %v167 = vpop.f32.mrf.mxu0
  %v168 = vadd.f32 %v99, %v167
  %v169 = vpop.f32.mrf.mxu0
  %170 = vmatprep.mubr.f32.mxu0 0.0
  %171 = vmatmul.mubr.f32.gmra.mxu0 %v15
  %v172 = vpop.f32.mrf.mxu0
  %v173 = vadd.f32 %v99, %v172
  %v174 = vpop.f32.mrf.mxu0
  %175 = vmatprep.mubr.f32.mxu0 0.0
  %176 = vmatmul.mubr.f32.gmra.mxu0 %v16
  %v177 = vpop.f32.mrf.mxu0
  %v178 = vadd.f32 %v99, %v177
  %v179 = vpop.f32.mrf.mxu0
  %180 = vmatprep.mubr.f32.mxu0 0.0
  %181 = vmatmul.mubr.f32.gmra.mxu0 %v17
  %v182 = vpop.f32.mrf.mxu0
  %v183 = vadd.f32 %v99, %v182
  %v184 = vpop.f32.mrf.mxu0
  %185 = vmatprep.mubr.f32.mxu0 0.0
  %186 = vmatmul.mubr.f32.gmra.mxu0 %v18
  %v187 = vpop.f32.mrf.mxu0
  %v188 = vadd.f32 %v99, %v187
  %v189 = vpop.f32.mrf.mxu0
  %190 = vmatprep.mubr.f32.mxu0 0.0
  %191 = vmatmul.mubr.f32.gmra.mxu0 %v19
  %v192 = vpop.f32.mrf.mxu0
  %v193 = vadd.f32 %v99, %v192
  %v194 = vpop.f32.mrf.mxu0
  %195 = vmatprep.mubr.f32.mxu0 0.0
  %196 = vmatmul.mubr.f32.gmra.mxu0 %v20
  %v197 = vpop.f32.mrf.mxu0
  %v198 = vadd.f32 %v99, %v197
  %v199 = vpop.f32.mrf.mxu0
  %200 = vmatprep.mubr.f32.mxu0 0.0
  %201 = vmatmul.mubr.f32.gmra.mxu0 %v21
  %v202 = vpop.f32.mrf.mxu0
  %v203 = vadd.f32 %v99, %v202
  %v204 = vpop.f32.mrf.mxu0
  %205 = vmatprep.mubr.f32.mxu0 0.0
  %206 = vmatmul.mubr.f32.gmra.mxu0 %v22
  %v207 = vpop.f32.mrf.mxu0
  %v208 = vadd.f32 %v99, %v207
  %v209 = vpop.f32.mrf.mxu0
  %210 = vmatprep.mubr.f32.mxu0 0.0
  %211 = vmatmul.mubr.f32.gmra.mxu0 %v23
  %v212 = vpop.f32.mrf.mxu0
  %v213 = vadd.f32 %v99, %v212
  %v214 = vpop.f32.mrf.mxu0
  %215 = vmatprep.mubr.f32.mxu0 0.0
  %216 = vmatmul.mubr.f32.gmra.mxu0 %v24
  %v217 = vpop.f32.mrf.mxu0
  %v218 = vadd.f32 %v99, %v217
  %v219 = vpop.f32.mrf.mxu0
  %220 = vmatprep.mubr.f32.mxu0 0.0
  %221 = vmatmul.mubr.f32.gmra.mxu0 %v25
  %v222 = vpop.f32.mrf.mxu0
  %v223 = vadd.f32 %v99, %v222
  %v224 = vpop.f32.mrf.mxu0
  %225 = vmatprep.mubr.f32.mxu0 0.0
  %226 = vmatmul.mubr.f32.gmra.mxu0 %v26
  %v227 = vpop.f32.mrf.mxu0
  %v228 = vadd.f32 %v99, %v227
  %v229 = vpop.f32.mrf.mxu0
  %230 = vmatprep.mubr.f32.mxu0 0.0
  %231 = vmatmul.mubr.f32.gmra.mxu0 %v27
  %v232 = vpop.f32.mrf.mxu0
  %v233 = vadd.f32 %v99, %v232
  %v234 = vpop.f32.mrf.mxu0
  %235 = vmatprep.mubr.f32.mxu0 0.0
  %236 = vmatmul.mubr.f32.gmra.mxu0 %v28
  %v237 = vpop.f32.mrf.mxu0
  %v238 = vadd.f32 %v99, %v237
  %v239 = vpop.f32.mrf.mxu0
  %240 = vmatprep.mubr.f32.mxu0 0.0
  %241 = vmatmul.mubr.f32.gmra.mxu0 %v29
  %v242 = vpop.f32.mrf.mxu0
  %v243 = vadd.f32 %v99, %v242
  %v244 = vpop.f32.mrf.mxu0
  %245 = vmatprep.mubr.f32.mxu0 0.0
  %246 = vmatmul.mubr.f32.gmra.mxu0 %v30
  %v247 = vpop.f32.mrf.mxu0
  %v248 = vadd.f32 %v99, %v247
  %v249 = vpop.f32.mrf.mxu0
  %250 = vmatprep.mubr.f32.mxu0 0.0
  %251 = vmatmul.mubr.f32.gmra.mxu0 %v31
  %v252 = vpop.f32.mrf.mxu0
  %v253 = vadd.f32 %v99, %v252
  %v254 = vpop.f32.mrf.mxu0
  %255 = vmatprep.mubr.f32.mxu0 0.0
  %256 = vmatmul.mubr.f32.gmra.mxu0 %v32
  %v257 = vpop.f32.mrf.mxu0
  %v258 = vadd.f32 %v99, %v257
  %v259 = vpop.f32.mrf.mxu0
  %260 = vmatprep.mubr.f32.mxu0 0.0
  %261 = vmatmul.mubr.f32.gmra.mxu0 %v33
  %v262 = vpop.f32.mrf.mxu0
  %v263 = vadd.f32 %v99, %v262
  %v264 = vpop.f32.mrf.mxu0
  %265 = vmatprep.mubr.f32.mxu0 0.0
  %266 = vmatmul.mubr.f32.gmra.mxu0 %v34
  %v267 = vpop.f32.mrf.mxu0
  %v268 = vadd.f32 %v99, %v267
  %v269 = vpop.f32.mrf.mxu0
  %270 = vmatprep.mubr.f32.mxu0 0.0
  %271 = vmatmul.mubr.f32.gmra.mxu0 %v35
  %v272 = vpop.f32.mrf.mxu0
  %v273 = vadd.f32 %v99, %v272
  %v274 = vpop.f32.mrf.mxu0
  %275 = vmatprep.mubr.f32.mxu0 0.0
  %276 = vmatmul.mubr.f32.gmra.mxu0 %v36
  %v277 = vpop.f32.mrf.mxu0
  %v278 = vadd.f32 %v99, %v277
  %v279 = vpop.f32.mrf.mxu0
  %280 = vmatprep.mubr.f32.mxu0 0.0
  %281 = vmatmul.mubr.f32.gmra.mxu0 %v37
  %v282 = vpop.f32.mrf.mxu0
  %v283 = vadd.f32 %v99, %v282
  %v284 = vpop.f32.mrf.mxu0
  %285 = vmatprep.mubr.f32.mxu0 0.0
  %286 = vmatmul.mubr.f32.gmra.mxu0 %v38
  %v287 = vpop.f32.mrf.mxu0
  %v288 = vadd.f32 %v99, %v287
  %v289 = vpop.f32.mrf.mxu0
  %290 = vmatprep.mubr.f32.mxu0 0.0
  %291 = vmatmul.mubr.f32.gmra.mxu0 %v39
  %v292 = vpop.f32.mrf.mxu0
  %v293 = vadd.f32 %v99, %v292
  %v294 = vpop.f32.mrf.mxu0
  %295 = vmatprep.mubr.f32.mxu0 0.0
  %296 = vmatmul.mubr.f32.gmra.mxu0 %v40
  %v297 = vpop.f32.mrf.mxu0
  %v298 = vadd.f32 %v99, %v297
  %v299 = vpop.f32.mrf.mxu0
  %300 = vmatprep.mubr.f32.mxu0 0.0
  %301 = vmatmul.mubr.f32.gmra.mxu0 %v41
  %v302 = vpop.f32.mrf.mxu0
  %v303 = vadd.f32 %v99, %v302
  %v304 = vpop.f32.mrf.mxu0
  %305 = vmatprep.mubr.f32.mxu0 0.0
  %306 = vmatmul.mubr.f32.gmra.mxu0 %v42
  %v307 = vpop.f32.mrf.mxu0
  %v308 = vadd.f32 %v99, %v307
  %v309 = vpop.f32.mrf.mxu0
  %310 = vmatprep.mubr.f32.mxu0 0.0
  %311 = vmatmul.mubr.f32.gmra.mxu0 %v43
  %v312 = vpop.f32.mrf.mxu0
  %v313 = vadd.f32 %v99, %v312
  %v314 = vpop.f32.mrf.mxu0
  %315 = vmatprep.mubr.f32.mxu0 0.0
  %316 = vmatmul.mubr.f32.gmra.mxu0 %v44
  %v317 = vpop.f32.mrf.mxu0
  %v318 = vadd.f32 %v99, %v317
  %v319 = vpop.f32.mrf.mxu0
  %320 = vmatprep.mubr.f32.mxu0 0.0
  %321 = vmatmul.mubr.f32.gmra.mxu0 %v45
  %v322 = vpop.f32.mrf.mxu0
  %v323 = vadd.f32 %v99, %v322
  %v324 = vpop.f32.mrf.mxu0
  %325 = vmatprep.mubr.f32.mxu0 0.0
  %326 = vmatmul.mubr.f32.gmra.mxu0 %v46
  %v327 = vpop.f32.mrf.mxu0
  %v328 = vadd.f32 %v99, %v327
  %v329 = vpop.f32.mrf.mxu0
  %330 = vmatprep.mubr.f32.mxu0 0.0
  %331 = vmatmul.mubr.f32.gmra.mxu0 %v47
  %v332 = vpop.f32.mrf.mxu0
  %v333 = vadd.f32 %v99, %v332
  %v334 = vpop.f32.mrf.mxu0
  %335 = vmatprep.mubr.f32.mxu0 0.0
  %336 = vmatmul.mubr.f32.gmra.mxu0 %v48
  %v337 = vpop.f32.mrf.mxu0
  %v338 = vadd.f32 %v99, %v337
  %v339 = vpop.f32.mrf.mxu0
  %340 = vmatprep.mubr.f32.mxu0 0.0
  %341 = vmatmul.mubr.f32.gmra.mxu0 %v49
  %v342 = vpop.f32.mrf.mxu0
  %v343 = vadd.f32 %v99, %v342
  %v344 = vpop.f32.mrf.mxu0
  %345 = vmatprep.mubr.f32.mxu0 0.0
  %346 = vmatmul.mubr.f32.gmra.mxu0 %v50
  %v347 = vpop.f32.mrf.mxu0
  %v348 = vadd.f32 %v99, %v347
  %v349 = vpop.f32.mrf.mxu0
  %350 = vmatprep.mubr.f32.mxu0 0.0
  %351 = vmatmul.mubr.f32.gmra.mxu0 %v51
  %v352 = vpop.f32.mrf.mxu0
  %v353 = vadd.f32 %v99, %v352
  %v354 = vpop.f32.mrf.mxu0
  %355 = vmatprep.mubr.f32.mxu0 0.0
  %356 = vmatmul.mubr.f32.gmra.mxu0 %v52
  %v357 = vpop.f32.mrf.mxu0
  %v358 = vadd.f32 %v99, %v357
  %v359 = vpop.f32.mrf.mxu0
  %360 = vmatprep.mubr.f32.mxu0 0.0
  %361 = vmatmul.mubr.f32.gmra.mxu0 %v53
  %v362 = vpop.f32.mrf.mxu0
  %v363 = vadd.f32 %v99, %v362
  %v364 = vpop.f32.mrf.mxu0
  %365 = vmatprep.mubr.f32.mxu0 0.0
  %366 = vmatmul.mubr.f32.gmra.mxu0 %v54
  %v367 = vpop.f32.mrf.mxu0
  %v368 = vadd.f32 %v99, %v367
  %v369 = vpop.f32.mrf.mxu0
  %370 = vmatprep.mubr.f32.mxu0 0.0
  %371 = vmatmul.mubr.f32.gmra.mxu0 %v55
  %v372 = vpop.f32.mrf.mxu0
  %v373 = vadd.f32 %v99, %v372
  %v374 = vpop.f32.mrf.mxu0
  %375 = vmatprep.mubr.f32.mxu0 0.0
  %376 = vmatmul.mubr.f32.gmra.mxu0 %v56
  %v377 = vpop.f32.mrf.mxu0
  %v378 = vadd.f32 %v99, %v377
  %v379 = vpop.f32.mrf.mxu0
  %380 = vmatprep.mubr.f32.mxu0 0.0
  %381 = vmatmul.mubr.f32.gmra.mxu0 %v57
  %v382 = vpop.f32.mrf.mxu0
  %v383 = vadd.f32 %v99, %v382
  %v384 = vpop.f32.mrf.mxu0
  %385 = vmatprep.mubr.f32.mxu0 0.0
  %386 = vmatmul.mubr.f32.gmra.mxu0 %v58
  %v387 = vpop.f32.mrf.mxu0
  %v388 = vadd.f32 %v99, %v387
  %v389 = vpop.f32.mrf.mxu0
  %390 = vmatprep.mubr.f32.mxu0 0.0
  %391 = vmatmul.mubr.f32.gmra.mxu0 %v59
  %v392 = vpop.f32.mrf.mxu0
  %v393 = vadd.f32 %v99, %v392
  %v394 = vpop.f32.mrf.mxu0
  %395 = vmatprep.mubr.f32.mxu0 0.0
  %396 = vmatmul.mubr.f32.gmra.mxu0 %v60
  %v397 = vpop.f32.mrf.mxu0
  %v398 = vadd.f32 %v99, %v397
  %v399 = vpop.f32.mrf.mxu0
  %400 = vmatprep.mubr.f32.mxu0 0.0
  %401 = vmatmul.mubr.f32.gmra.mxu0 %v61
  %v402 = vpop.f32.mrf.mxu0
  %v403 = vadd.f32 %v99, %v402
  %v404 = vpop.f32.mrf.mxu0
  %405 = vmatprep.mubr.f32.mxu0 0.0
  %406 = vmatmul.mubr.f32.gmra.mxu0 %v62
  %v407 = vpop.f32.mrf.mxu0
  %v408 = vadd.f32 %v99, %v407
  %v409 = vpop.f32.mrf.mxu0
  %410 = vmatprep.mubr.f32.mxu0 0.0
  %411 = vmatmul.mubr.f32.gmra.mxu0 %v63
  %v412 = vpop.f32.mrf.mxu0
  %v413 = vadd.f32 %v99, %v412
  %v414 = vpop.f32.mrf.mxu0
  %415 = vmatprep.mubr.f32.mxu0 0.0
  %416 = vmatmul.mubr.f32.gmra.mxu0 %v64
  %v417 = vpop.f32.mrf.mxu0
  %v418 = vadd.f32 %v99, %v417
  %v419 = vpop.f32.mrf.mxu0
  %420 = vmatprep.mubr.f32.mxu0 0.0
  %421 = vmatmul.mubr.f32.gmra.mxu0 %v65
  %v422 = vpop.f32.mrf.mxu0
  %v423 = vadd.f32 %v99, %v422
  %v424 = vpop.f32.mrf.mxu0
  %425 = vmatprep.mubr.f32.mxu0 0.0
  %426 = vmatmul.mubr.f32.gmra.mxu0 %v66
  %v427 = vpop.f32.mrf.mxu0
  %v428 = vadd.f32 %v99, %v427
  %v429 = vpop.f32.mrf.mxu0
  %430 = vmatprep.mubr.f32.mxu0 0.0
  %431 = vmatmul.mubr.f32.gmra.mxu0 %v67
  %v432 = vpop.f32.mrf.mxu0
  %v433 = vadd.f32 %v99, %v432
  %v434 = vpop.f32.mrf.mxu0
  %435 = vmatprep.mubr.f32.mxu0 0.0
  %436 = vmatmul.mubr.f32.gmra.mxu0 %v68
  %v437 = vpop.f32.mrf.mxu0
  %v438 = vadd.f32 %v99, %v437
  %v439 = vpop.f32.mrf.mxu0
  %440 = vmatprep.mubr.f32.mxu0 0.0
  %441 = vmatmul.mubr.f32.gmra.mxu0 %v69
  %v442 = vpop.f32.mrf.mxu0
  %v443 = vadd.f32 %v99, %v442
  %v444 = vpop.f32.mrf.mxu0
  %445 = vmatprep.mubr.f32.mxu0 0.0
  %446 = vmatmul.mubr.f32.gmra.mxu0 %v70
  %v447 = vpop.f32.mrf.mxu0
  %v448 = vadd.f32 %v99, %v447
  %v449 = vpop.f32.mrf.mxu0
  %450 = vmatprep.mubr.f32.mxu0 0.0
  %451 = vmatmul.mubr.f32.gmra.mxu0 %v71
  %v452 = vpop.f32.mrf.mxu0
  %v453 = vadd.f32 %v99, %v452
  %v454 = vpop.f32.mrf.mxu0
  %455 = vmatprep.mubr.f32.mxu0 0.0
  %456 = vmatmul.mubr.f32.gmra.mxu0 %v72
  %v457 = vpop.f32.mrf.mxu0
  %v458 = vadd.f32 %v99, %v457
  %v459 = vpop.f32.mrf.mxu0
  %460 = vmatprep.mubr.f32.mxu0 0.0
  %461 = vmatmul.mubr.f32.gmra.mxu0 %v73
  %v462 = vpop.f32.mrf.mxu0
  %v463 = vadd.f32 %v99, %v462
  %v464 = vpop.f32.mrf.mxu0
  %465 = vmatprep.mubr.f32.mxu0 0.0
  %466 = vmatmul.mubr.f32.gmra.mxu0 %v74
  %v467 = vpop.f32.mrf.mxu0
  %v468 = vadd.f32 %v99, %v467
  %v469 = vpop.f32.mrf.mxu0
  %470 = vmatprep.mubr.f32.mxu0 0.0
  %471 = vmatmul.mubr.f32.gmra.mxu0 %v75
  %v472 = vpop.f32.mrf.mxu0
  %v473 = vadd.f32 %v99, %v472
  %v474 = vpop.f32.mrf.mxu0
  %475 = vmatprep.mubr.f32.mxu0 0.0
  %476 = vmatmul.mubr.f32.gmra.mxu0 %v76
  %v477 = vpop.f32.mrf.mxu0
  %v478 = vadd.f32 %v99, %v477
  %v479 = vpop.f32.mrf.mxu0
  %480 = vmatprep.mubr.f32.mxu0 0.0
  %481 = vmatmul.mubr.f32.gmra.mxu0 %v77
  %v482 = vpop.f32.mrf.mxu0
  %v483 = vadd.f32 %v99, %v482
  %v484 = vpop.f32.mrf.mxu0
  %485 = vdwg.mxu0
  %486 = vst [vmem:[%s3] sm:$0xff] %v168
  %487 = vst [vmem:[%s3 + $0x8] sm:$0xff] %v173
  %488 = vst [vmem:[%s3 + $0x10] sm:$0xff] %v178
  %489 = vst [vmem:[%s3 + $0x18] sm:$0xff] %v183
  %490 = vst [vmem:[%s3 + $0x20] sm:$0xff] %v188
  %491 = vst [vmem:[%s3 + $0x28] sm:$0xff] %v193
  %492 = vst [vmem:[%s3 + $0x30] sm:$0xff] %v198
  %493 = vst [vmem:[%s3 + $0x38] sm:$0xff] %v203
  %494 = vst [vmem:[%s3 + $0x40] sm:$0xff] %v208
  %495 = vst [vmem:[%s3 + $0x48] sm:$0xff] %v213
  %496 = vst [vmem:[%s3 + $0x50] sm:$0xff] %v218
  %497 = vst [vmem:[%s3 + $0x58] sm:$0xff] %v223
  %498 = vst [vmem:[%s3 + $0x60] sm:$0xff] %v228
  %499 = vst [vmem:[%s3 + $0x68] sm:$0xff] %v233
  %500 = vst [vmem:[%s3 + $0x70] sm:$0xff] %v238
  %501 = vst [vmem:[%s3 + $0x78] sm:$0xff] %v243
  %502 = vst [vmem:[%s3 + $0x80] sm:$0xff] %v248
  %503 = vst [vmem:[%s3 + $0x88] sm:$0xff] %v253
  %504 = vst [vmem:[%s3 + $0x90] sm:$0xff] %v258
  %505 = vst [vmem:[%s3 + $0x98] sm:$0xff] %v263
  %506 = vst [vmem:[%s3 + $0xa0] sm:$0xff] %v268
  %507 = vst [vmem:[%s3 + $0xa8] sm:$0xff] %v273
  %508 = vst [vmem:[%s3 + $0xb0] sm:$0xff] %v278
  %509 = vst [vmem:[%s3 + $0xb8] sm:$0xff] %v283
  %510 = vst [vmem:[%s3 + $0xc0] sm:$0xff] %v288
  %511 = vst [vmem:[%s3 + $0xc8] sm:$0xff] %v293
  %512 = vst [vmem:[%s3 + $0xd0] sm:$0xff] %v298
  %513 = vst [vmem:[%s3 + $0xd8] sm:$0xff] %v303
  %514 = vst [vmem:[%s3 + $0xe0] sm:$0xff] %v308
  %515 = vst [vmem:[%s3 + $0xe8] sm:$0xff] %v313
  %516 = vst [vmem:[%s3 + $0xf0] sm:$0xff] %v318
  %517 = vst [vmem:[%s3 + $0xf8] sm:$0xff] %v323
  %518 = vst [vmem:[%s3 + $0x100] sm:$0xff] %v328
  %519 = vst [vmem:[%s3 + $0x108] sm:$0xff] %v333
  %520 = vst [vmem:[%s3 + $0x110] sm:$0xff] %v338
  %521 = vst [vmem:[%s3 + $0x118] sm:$0xff] %v343
  %522 = vst [vmem:[%s3 + $0x120] sm:$0xff] %v348
  %523 = vst [vmem:[%s3 + $0x128] sm:$0xff] %v353
  %524 = vst [vmem:[%s3 + $0x130] sm:$0xff] %v358
  %525 = vst [vmem:[%s3 + $0x138] sm:$0xff] %v363
  %526 = vst [vmem:[%s3 + $0x140] sm:$0xff] %v368
  %527 = vst [vmem:[%s3 + $0x148] sm:$0xff] %v373
  %528 = vst [vmem:[%s3 + $0x150] sm:$0xff] %v378
  %529 = vst [vmem:[%s3 + $0x158] sm:$0xff] %v383
  %530 = vst [vmem:[%s3 + $0x160] sm:$0xff] %v388
  %531 = vst [vmem:[%s3 + $0x168] sm:$0xff] %v393
  %532 = vst [vmem:[%s3 + $0x170] sm:$0xff] %v398
  %533 = vst [vmem:[%s3 + $0x178] sm:$0xff] %v403
  %534 = vst [vmem:[%s3 + $0x180] sm:$0xff] %v408
  %535 = vst [vmem:[%s3 + $0x188] sm:$0xff] %v413
  %536 = vst [vmem:[%s3 + $0x190] sm:$0xff] %v418
  %537 = vst [vmem:[%s3 + $0x198] sm:$0xff] %v423
  %538 = vst [vmem:[%s3 + $0x1a0] sm:$0xff] %v428
  %539 = vst [vmem:[%s3 + $0x1a8] sm:$0xff] %v433
  %540 = vst [vmem:[%s3 + $0x1b0] sm:$0xff] %v438
  %541 = vst [vmem:[%s3 + $0x1b8] sm:$0xff] %v443
  %542 = vst [vmem:[%s3 + $0x1c0] sm:$0xff] %v448
  %543 = vst [vmem:[%s3 + $0x1c8] sm:$0xff] %v453
  %544 = vst [vmem:[%s3 + $0x1d0] sm:$0xff] %v458
  %545 = vst [vmem:[%s3 + $0x1d8] sm:$0xff] %v463
  %546 = vst [vmem:[%s3 + $0x1e0] sm:$0xff] %v468
  %547 = vst [vmem:[%s3 + $0x1e8] sm:$0xff] %v473
  %548 = vst [vmem:[%s3 + $0x1f0] sm:$0xff] %v478
  %549 = vst [vmem:[%s3 + $0x1f8] sm:$0xff] %v483
  // Predicated region
  $region14: #{gcn_conv.2} parent=0 // pred_check
    _
  $region15: #{gcn_conv.2} parent=0 // pred_check_branch
    %551 = sbr.rel (0) target = $region17
  $region16: #{gcn_conv.2} parent=0 // pred_region
    _
  $region17: #{gcn_conv.2} parent=0 // pred_fallthru
    _
  // Predicated region
  $region18: #{gcn_conv.2} parent=0 // pred_check
    _
  $region19: #{gcn_conv.2} parent=0 // pred_check_branch
    %553 = sbr.rel (0) target = $region21
  $region20: #{gcn_conv.2} parent=0 // pred_region
    _
  $region21: #{gcn_conv.2} parent=0 // pred_fallthru
    _

// kernel: mul.9
$region0: #{mul.9}
  #allocation0 [shape = 's32[1]{0}', space=sflag, size = 0x4, scoped, tag = 'scoped memory for mul.9']
  %s0 = inlined_call_operand.vmem [shape: f32[40], index: 0, kind: input, shape index: {}]
  %s1 = inlined_call_operand.vmem [shape: f32[40], index: 1, kind: input, shape index: {}]
  %s2 = inlined_call_operand.vmem [shape: f32[40], index: 2, kind: output, shape index: {}]
  %v3 = vld [vmem:[%s0] sm:$0x1]
  %v4 = vld [vmem:[%s1] sm:$0x1]
  %5 = xla_tuple %v3, %v4
  %6 = xla_tuple %5
  %v7 = vmul.f32 %v3, %v4
  %8 = xla_tuple %v7
  %9 = vst [vmem:[%s2] sm:$0x1] %v7

// kernel: ne.8
$region0: #{ne.8}
  #allocation0 [shape = 's32[1]{0}', space=sflag, size = 0x4, scoped, tag = 'scoped memory for ne.8']
  %s0 = inlined_call_operand.<no memory space> [shape: s32[], index: 0, kind: input, shape index: {}]
  %s1 = inlined_call_operand.vmem [shape: s32[4], index: 1, kind: output, shape index: {}]
  %v2 = vstv %s0
  %3 = vst [vmem:[%s1] sm:$0x1] %v2

// kernel: gcn_conv.3
$region0: #{gcn_conv.3}
  #allocation0 [shape = 'u32[]', space=smem, size = 0x4, offset = 0x4, fixed_abs, tag = 'smem constant byte address 0x4 - core index']
  #allocation1 [shape = 'u32[144,128]{1,0:T(1,128)}', space=vmem, size = 0x12000, scoped, tag = 'internal scratch']
  #allocation2 [shape = 's32[128,512]{1,0:T(8,128)}', space=vmem, size = 0x40000, scoped, tag = 'scratch operand']
  #allocation3 [shape = 's32[1]{0}', space=sflag, size = 0x4, scoped, tag = 'scoped memory for gcn_conv.3']
  #allocation4 [shape = 'u8[512]{0}', space=smem, size = 0x200, scoped, tag = 'prefetched SMEM operand 0']
  #allocation5 [shape = 'u8[512]{0}', space=smem, size = 0x200, scoped, tag = 'prefetched SMEM operand 1']
  %s0 = inlined_call_operand.vmem [shape: s32[5], index: 0, kind: input, shape index: {}]
  %s1 = inlined_call_operand.vmem [shape: s32[5], index: 1, kind: input, shape index: {}]
  %s2 = inlined_call_operand.vmem [shape: f32[512,128], index: 2, kind: input, shape index: {}]
  %s3 = inlined_call_operand.vmem [shape: f32[1,128], index: 3, kind: input, shape index: {}]
  %s4 = inlined_call_operand.vmem [shape: f32[512,1], index: 4, kind: input, shape index: {}]
  %s5 = inlined_call_operand.vmem [shape: bf16[2560,128], index: 5, kind: input, shape index: {}]
  %s6 = inlined_call_operand.vmem [shape: s32[5,1,512], index: 6, kind: input, shape index: {}]
  %s7 = inlined_call_operand.vmem [shape: f32[512,128], index: 7, kind: output, shape index: {}]
  %s8 = sld [smem:[#allocation0]]
  $region61: #{gcn_conv.3} parent=0
    _
  %s10 = ssub.s32 1, %s8
  %s11 = scalar_select 0, %s10, %s8
  %s12 = sshll.u32 %s0, 4
  %s13 = int_to_ptr.vmem [resolvable:$true] %s12
  %15 = dma.vmem_to_smem %s13, 16, [#allocation4], [#allocation3]
  %s16 = sshll.u32 %s1, 4
  %s17 = int_to_ptr.vmem [resolvable:$true] %s16
  %19 = dma.vmem_to_smem %s17, 16, [#allocation5], [#allocation3]
  %20 = dma.done [#allocation3], 32
  %21 = sfence
  loop: start=0, step=1, limit=7
  $region2: #{gcn_conv.3} parent=0 // loop_pre_header
    _
  $region3: #{gcn_conv.3} parent=0 // loop_header
    %s23 = sphi 0, %s27
    %p24 = scmp.ge.s32.totalorder %s23, 7
    %s35 = sphi 0, %s37
    %s38 = sphi 0, %s35
    %s39 = sphi 0, %s38
    %s55 = sphi 0, %s39
    %s59 = sphi 0, %s59
    %s61 = sphi 0, %s59
    %s62 = sphi 0, %s61
    %s76 = sphi 0, %s62
    %s84 = sphi 0, %s86
    %s87 = sphi 0, %s84
    %s88 = sphi 0, %s87
    %s104 = sphi 0, %s88
    %s110 = sphi 0, %s112
    %s113 = sphi 0, %s110
    %s114 = sphi 0, %s113
    %s130 = sphi 0, %s114
    %s136 = sphi 0, %s138
    %s139 = sphi 0, %s136
    %s140 = sphi 0, %s139
    %s156 = sphi 0, %s140
    %s164 = sphi 0, %s166
    %s167 = sphi 0, %s164
    %s168 = sphi 0, %s167
    %s184 = sphi 0, %s168
  $region4: #{gcn_conv.3} parent=0 // loop_header_branch
    %26 = sbr.rel (%p24) target = $region8
  $region5: #{gcn_conv.3} parent=0 // loop_body
    %s28 = ssub.s32 %s23, 1
    %s29 = ssub.s32 %s23, 2
    %s30 = sadd.s32 %s23, 1
    %s31 = sld [smem:[#allocation4 + %s23]]
    %s32 = sld [smem:[#allocation4 + %s30]]
    %s33 = ssub.s32 %s31, %s32
    %p34 = scmp.eq.s32.totalorder %s33, 0
    %s36 = sadd.s32 %s35, 1
    %s37 = scalar_select %p34, %s35, %s36
    %p40 = pneg %p34
    %p41 = scmp.eq.s32.totalorder %s23, 4
    %p42 = por %p40, %p41
    %p43 = scmp.ne.s32.totalorder %s35, %s38
    %p44 = scmp.eq.s32.totalorder %s23, 0
    %p45 = por %p43, %p44
    %p46 = scmp.ne.s32.totalorder %s35, %s38
    %p47 = scmp.eq.s32.totalorder %s28, 4
    %p48 = por %p46, %p47
    %p49 = scmp.ne.s32.totalorder %s38, %s39
    %p50 = scmp.eq.s32.totalorder %s28, 0
    %p51 = por %p49, %p50
    %p52 = scmp.ne.s32.totalorder %s38, %s39
    %p53 = scmp.eq.s32.totalorder %s29, 4
    %p54 = por %p52, %p53
    %p56 = scmp.ne.s32.totalorder %s39, %s55
    %p57 = scmp.eq.s32.totalorder %s29, 0
    %p58 = por %p56, %p57
    %s60 = sadd.s32 %s59, 1
    %p63 = scmp.eq.s32.totalorder %s23, 4
    %p64 = scmp.ne.s32.totalorder %s59, %s61
    %p65 = scmp.eq.s32.totalorder %s23, 0
    %p66 = por %p64, %p65
    %p67 = scmp.ne.s32.totalorder %s59, %s61
    %p68 = scmp.eq.s32.totalorder %s28, 4
    %p69 = por %p67, %p68
    %p70 = scmp.ne.s32.totalorder %s61, %s62
    %p71 = scmp.eq.s32.totalorder %s28, 0
    %p72 = por %p70, %p71
    %p73 = scmp.ne.s32.totalorder %s61, %s62
    %p74 = scmp.eq.s32.totalorder %s29, 4
    %p75 = por %p73, %p74
    %p77 = scmp.ne.s32.totalorder %s62, %s76
    %p78 = scmp.eq.s32.totalorder %s29, 0
    %p79 = por %p77, %p78
    %s80 = sld [smem:[#allocation4 + %s23]]
    %s81 = sld [smem:[#allocation4 + %s30]]
    %s82 = ssub.s32 %s80, %s81
    %p83 = scmp.eq.s32.totalorder %s82, 0
    %s85 = sadd.s32 %s84, 1
    %s86 = scalar_select %p83, %s84, %s85
    %p89 = pneg %p83
    %p90 = scmp.eq.s32.totalorder %s23, 4
    %p91 = por %p89, %p90
    %p92 = scmp.ne.s32.totalorder %s84, %s87
    %p93 = scmp.eq.s32.totalorder %s23, 0
    %p94 = por %p92, %p93
    %p95 = scmp.ne.s32.totalorder %s84, %s87
    %p96 = scmp.eq.s32.totalorder %s28, 4
    %p97 = por %p95, %p96
    %p98 = scmp.ne.s32.totalorder %s87, %s88
    %p99 = scmp.eq.s32.totalorder %s28, 0
    %p100 = por %p98, %p99
    %p101 = scmp.ne.s32.totalorder %s87, %s88
    %p102 = scmp.eq.s32.totalorder %s29, 4
    %p103 = por %p101, %p102
    %p105 = scmp.ne.s32.totalorder %s88, %s104
    %p106 = scmp.eq.s32.totalorder %s29, 0
    %p107 = por %p105, %p106
    %s108 = ssub.s32 %s23, %s30
    %p109 = scmp.eq.s32.totalorder %s108, 0
    %s111 = sadd.s32 %s110, 1
    %s112 = scalar_select %p109, %s110, %s111
    %p115 = pneg %p109
    %p116 = scmp.eq.s32.totalorder %s23, 4
    %p117 = por %p115, %p116
    %p118 = scmp.ne.s32.totalorder %s110, %s113
    %p119 = scmp.eq.s32.totalorder %s23, 0
    %p120 = por %p118, %p119
    %p121 = scmp.ne.s32.totalorder %s110, %s113
    %p122 = scmp.eq.s32.totalorder %s28, 4
    %p123 = por %p121, %p122
    %p124 = scmp.ne.s32.totalorder %s113, %s114
    %p125 = scmp.eq.s32.totalorder %s28, 0
    %p126 = por %p124, %p125
    %p127 = scmp.ne.s32.totalorder %s113, %s114
    %p128 = scmp.eq.s32.totalorder %s29, 4
    %p129 = por %p127, %p128
    %p131 = scmp.ne.s32.totalorder %s114, %s130
    %p132 = scmp.eq.s32.totalorder %s29, 0
    %p133 = por %p131, %p132
    %s134 = ssub.s32 %s23, %s30
    %p135 = scmp.eq.s32.totalorder %s134, 0
    %s137 = sadd.s32 %s136, 1
    %s138 = scalar_select %p135, %s136, %s137
    %p141 = pneg %p135
    %p142 = scmp.eq.s32.totalorder %s23, 4
    %p143 = por %p141, %p142
    %p144 = scmp.ne.s32.totalorder %s136, %s139
    %p145 = scmp.eq.s32.totalorder %s23, 0
    %p146 = por %p144, %p145
    %p147 = scmp.ne.s32.totalorder %s136, %s139
    %p148 = scmp.eq.s32.totalorder %s28, 4
    %p149 = por %p147, %p148
    %p150 = scmp.ne.s32.totalorder %s139, %s140
    %p151 = scmp.eq.s32.totalorder %s28, 0
    %p152 = por %p150, %p151
    %p153 = scmp.ne.s32.totalorder %s139, %s140
    %p154 = scmp.eq.s32.totalorder %s29, 4
    %p155 = por %p153, %p154
    %p157 = scmp.ne.s32.totalorder %s140, %s156
    %p158 = scmp.eq.s32.totalorder %s29, 0
    %p159 = por %p157, %p158
    %s160 = sld [smem:[#allocation4 + %s23]]
    %s161 = sld [smem:[#allocation4 + %s30]]
    %s162 = ssub.s32 %s160, %s161
    %p163 = scmp.eq.s32.totalorder %s162, 0
    %s165 = sadd.s32 %s164, 1
    %s166 = scalar_select %p163, %s164, %s165
    %p169 = pneg %p163
    %p170 = scmp.eq.s32.totalorder %s23, 4
    %p171 = por %p169, %p170
    %p172 = scmp.ne.s32.totalorder %s164, %s167
    %p173 = scmp.eq.s32.totalorder %s23, 0
    %p174 = por %p172, %p173
    %p175 = scmp.ne.s32.totalorder %s164, %s167
    %p176 = scmp.eq.s32.totalorder %s28, 4
    %p177 = por %p175, %p176
    %p178 = scmp.ne.s32.totalorder %s167, %s168
    %p179 = scmp.eq.s32.totalorder %s28, 0
    %p180 = por %p178, %p179
    %p181 = scmp.ne.s32.totalorder %s167, %s168
    %p182 = scmp.eq.s32.totalorder %s29, 4
    %p183 = por %p181, %p182
    %p185 = scmp.ne.s32.totalorder %s168, %s184
    %p186 = scmp.eq.s32.totalorder %s29, 0
    %p187 = por %p185, %p186
    %p188 = scmp.le.s32.totalorder 1, %s23
    %p189 = scmp.lt.s32.totalorder %s23, 6
    %p190 = pnand %p188, %p189
    %p191 = pneg %p190
    // Predicated region
    $region9: #{gcn_conv.3} parent=5 // pred_check
      _
    $region10: #{gcn_conv.3} parent=5 // pred_check_branch
      %193 = sbr.rel (%p190) target = $region12
    $region11: #{gcn_conv.3} parent=5 // pred_region
      %s194 = ssub.s32 %s23, 1
      // Predicated region
      $region13: #{gcn_conv.3} parent=11 // pred_check
        %p195 = pneg %p72
      $region14: #{gcn_conv.3} parent=11 // pred_check_branch
        %197 = sbr.rel (%p195) target = $region16
      $region15: #{gcn_conv.3} parent=11 // pred_region
        _
      $region16: #{gcn_conv.3} parent=11 // pred_fallthru
        _
    $region12: #{gcn_conv.3} parent=5 // pred_fallthru
      _
    %p198 = scmp.lt.s32.totalorder %s23, 5
    // Predicated region
    $region17: #{gcn_conv.3} parent=5 // pred_check
      %p199 = pneg %p198
    $region18: #{gcn_conv.3} parent=5 // pred_check_branch
      %201 = sbr.rel (%p199) target = $region20
    $region19: #{gcn_conv.3} parent=5 // pred_region
      // Predicated region
      $region21: #{gcn_conv.3} parent=19 // pred_check
        %p202 = pneg %p45
      $region22: #{gcn_conv.3} parent=19 // pred_check_branch
        %204 = sbr.rel (%p202) target = $region24
      $region23: #{gcn_conv.3} parent=19 // pred_region
        %s205 = sld [smem:[#allocation4 + %s23]]
        %s206 = smul.u32 16, %s205
        %p207 = scmp.lt.s32.totalorder %s206, 63
        %s208 = scalar_select %p207, %s206, 63
        %s209 = smul.addr %s208, 8
        %s210 = scalar_lea.vmem %s2, %s209
        %s211 = sld [smem:[#allocation4 + %s23]]
        %s212 = smul.u32 16, %s211
      $region24: #{gcn_conv.3} parent=19 // pred_fallthru
        _
      // Predicated region
      $region25: #{gcn_conv.3} parent=19 // pred_check
        %p213 = pneg %p94
      $region26: #{gcn_conv.3} parent=19 // pred_check_branch
        %215 = sbr.rel (%p213) target = $region28
      $region27: #{gcn_conv.3} parent=19 // pred_region
        %s216 = sld [smem:[#allocation4 + %s23]]
        %s217 = smul.u32 16, %s216
        %p218 = scmp.lt.s32.totalorder %s217, 63
        %s219 = scalar_select %p218, %s217, 63
        %s220 = smul.addr %s219, 8
        %s221 = scalar_lea.vmem %s4, %s220
        %s222 = sld [smem:[#allocation4 + %s23]]
        %s223 = smul.u32 16, %s222
      $region28: #{gcn_conv.3} parent=19 // pred_fallthru
        _
      // Predicated region
      $region29: #{gcn_conv.3} parent=19 // pred_check
        %p224 = pneg %p120
      $region30: #{gcn_conv.3} parent=19 // pred_check_branch
        %226 = sbr.rel (%p224) target = $region32
      $region31: #{gcn_conv.3} parent=19 // pred_region
        %s227 = smul.u32 64, %s23
        %p228 = scmp.lt.s32.totalorder %s227, 319
        %s229 = scalar_select %p228, %s227, 319
        %s230 = smul.addr %s229, 4
        %s231 = scalar_lea.vmem %s5, %s230
        %s232 = smul.u32 64, %s23
      $region32: #{gcn_conv.3} parent=19 // pred_fallthru
        _
      // Predicated region
      $region33: #{gcn_conv.3} parent=19 // pred_check
        %p233 = pneg %p146
      $region34: #{gcn_conv.3} parent=19 // pred_check_branch
        %235 = sbr.rel (%p233) target = $region36
      $region35: #{gcn_conv.3} parent=19 // pred_region
        %p236 = scmp.lt.s32.totalorder %s23, 4
        %s237 = scalar_select %p236, %s23, 4
        %s238 = smul.addr %s237, 4
        %s239 = scalar_lea.vmem %s6, %s238
      $region36: #{gcn_conv.3} parent=19 // pred_fallthru
        _
    $region20: #{gcn_conv.3} parent=5 // pred_fallthru
      _
    %p240 = scmp.le.s32.totalorder 1, %s23
    %p241 = scmp.lt.s32.totalorder %s23, 6
    %p242 = pnand %p240, %p241
    %p243 = pneg %p242
    // Predicated region
    $region37: #{gcn_conv.3} parent=5 // pred_check
      _
    $region38: #{gcn_conv.3} parent=5 // pred_check_branch
      %245 = sbr.rel (%p242) target = $region40
    $region39: #{gcn_conv.3} parent=5 // pred_region
      %s246 = ssub.s32 %s23, 1
      %s247 = sld [smem:[#allocation4 + %s28]]
      %s248 = smul.u32 16, %s247
      %p249 = scmp.lt.s32.totalorder %s248, 63
      %s250 = scalar_select %p249, %s248, 63
      %s251 = smul.addr %s250, 8
      %s252 = scalar_lea.vmem %s2, %s251
      %p253 = pneg %p51
      %p254 = pneg %p48
      %p255 = pneg %p72
      %p256 = pneg %p69
      %s257 = sld [smem:[#allocation4 + %s28]]
      %s258 = smul.u32 16, %s257
      %p259 = scmp.lt.s32.totalorder %s258, 63
      %s260 = scalar_select %p259, %s258, 63
      %s261 = smul.addr %s260, 8
      %s262 = scalar_lea.vmem %s4, %s261
      %p263 = pneg %p100
      %p264 = pneg %p97
      %s265 = smul.u32 64, %s28
      %p266 = scmp.lt.s32.totalorder %s265, 319
      %s267 = scalar_select %p266, %s265, 319
      %s268 = smul.addr %s267, 4
      %s269 = scalar_lea.vmem %s5, %s268
      %p270 = pneg %p126
      %p271 = pneg %p123
      %p272 = scmp.lt.s32.totalorder %s28, 4
      %s273 = scalar_select %p272, %s28, 4
      %s274 = smul.addr %s273, 4
      %s275 = scalar_lea.vmem %s6, %s274
      %p276 = pneg %p152
      %p277 = pneg %p149
      %p278 = pneg %p180
      %p279 = pneg %p177
      %s280 = sld [smem:[#allocation4 + %s28]]
      %s281 = smul.u32 16, %s280
      %p282 = scmp.lt.s32.totalorder %s281, 63
      %s283 = scalar_select %p282, %s281, 63
      %s284 = smul.addr %s283, 8
      %s285 = scalar_lea.vmem %s7, %s284
      %s286 = sld [smem:[#allocation4 + %s28]]
      %s287 = smul.u32 16, %s286
      %p288 = scmp.lt.s32.totalorder %s287, 63
      %s289 = scalar_select %p288, %s287, 63
      %s290 = smul.addr %s289, 8
      %s291 = scalar_lea.vmem %s2, %s290
      %s292 = sld [smem:[#allocation4 + %s28]]
      %s293 = smul.u32 16, %s292
      %s294 = sld [smem:[#allocation4 + %s28]]
      %s295 = smul.u32 16, %s294
      %p296 = scmp.lt.s32.totalorder %s295, 63
      %s297 = scalar_select %p296, %s295, 63
      %s298 = smul.addr %s297, 8
      %s299 = scalar_lea.vmem %s4, %s298
      %s300 = sld [smem:[#allocation4 + %s28]]
      %s301 = smul.u32 16, %s300
      %s302 = smul.u32 64, %s28
      %p303 = scmp.lt.s32.totalorder %s302, 319
      %s304 = scalar_select %p303, %s302, 319
      %s305 = smul.addr %s304, 4
      %s306 = scalar_lea.vmem %s5, %s305
      %s307 = smul.u32 64, %s28
      %p308 = scmp.lt.s32.totalorder %s28, 4
      %s309 = scalar_select %p308, %s28, 4
      %s310 = smul.addr %s309, 4
      %s311 = scalar_lea.vmem %s6, %s310
      %s312 = sld [smem:[#allocation4 + %s28]]
      %s313 = smul.u32 16, %s312
      %p314 = scmp.lt.s32.totalorder %s313, 63
      %s315 = scalar_select %p314, %s313, 63
      %s316 = smul.addr %s315, 8
      %s317 = scalar_lea.vmem %s7, %s316
      %s318 = sld [smem:[#allocation4 + %s28]]
      %s319 = smul.u32 16, %s318
      %p321 = scmp.eq.s32.totalorder %s28, 0
      // Predicated region
      $region41: #{gcn_conv.3} parent=39 // pred_check
        %p322 = pneg %p321
      $region42: #{gcn_conv.3} parent=39 // pred_check_branch
        %324 = sbr.rel (%p322) target = $region44
      $region43: #{gcn_conv.3} parent=39 // pred_region
        %v325 = vlaneseq
        %v326 = vshrl.u32 %v325, 7
        %v327 = vadd.s32 %v326, 8
        %v328 = vadd.s32 %v326, 16
        %v329 = vadd.s32 %v326, 24
        %v330 = vadd.s32 %v326, 32
        %v331 = vadd.s32 %v326, 40
        %v332 = vadd.s32 %v326, 48
        %v333 = vadd.s32 %v326, 56
        %v334 = vadd.s32 %v326, 64
        %v335 = vadd.s32 %v326, 72
        %v336 = vadd.s32 %v326, 80
        %v337 = vadd.s32 %v326, 88
        %v338 = vadd.s32 %v326, 96
        %v339 = vadd.s32 %v326, 104
        %v340 = vadd.s32 %v326, 112
        %v341 = vadd.s32 %v326, 120
        %342 = vst [vmem:[#allocation2] sm:$0xff] %v326
        %343 = vst [vmem:[#allocation2 + $0x8] sm:$0xff] %v326
        %344 = vst [vmem:[#allocation2 + $0x10] sm:$0xff] %v326
        %345 = vst [vmem:[#allocation2 + $0x18] sm:$0xff] %v326
        %346 = vst [vmem:[#allocation2 + $0x20] sm:$0xff] %v327
        %347 = vst [vmem:[#allocation2 + $0x28] sm:$0xff] %v327
        %348 = vst [vmem:[#allocation2 + $0x30] sm:$0xff] %v327
        %349 = vst [vmem:[#allocation2 + $0x38] sm:$0xff] %v327
        %350 = vst [vmem:[#allocation2 + $0x40] sm:$0xff] %v328
        %351 = vst [vmem:[#allocation2 + $0x48] sm:$0xff] %v328
        %352 = vst [vmem:[#allocation2 + $0x50] sm:$0xff] %v328
        %353 = vst [vmem:[#allocation2 + $0x58] sm:$0xff] %v328
        %354 = vst [vmem:[#allocation2 + $0x60] sm:$0xff] %v329
        %355 = vst [vmem:[#allocation2 + $0x68] sm:$0xff] %v329
        %356 = vst [vmem:[#allocation2 + $0x70] sm:$0xff] %v329
        %357 = vst [vmem:[#allocation2 + $0x78] sm:$0xff] %v329
        %358 = vst [vmem:[#allocation2 + $0x80] sm:$0xff] %v330
        %359 = vst [vmem:[#allocation2 + $0x88] sm:$0xff] %v330
        %360 = vst [vmem:[#allocation2 + $0x90] sm:$0xff] %v330
        %361 = vst [vmem:[#allocation2 + $0x98] sm:$0xff] %v330
        %362 = vst [vmem:[#allocation2 + $0xa0] sm:$0xff] %v331
        %363 = vst [vmem:[#allocation2 + $0xa8] sm:$0xff] %v331
        %364 = vst [vmem:[#allocation2 + $0xb0] sm:$0xff] %v331
        %365 = vst [vmem:[#allocation2 + $0xb8] sm:$0xff] %v331
        %366 = vst [vmem:[#allocation2 + $0xc0] sm:$0xff] %v332
        %367 = vst [vmem:[#allocation2 + $0xc8] sm:$0xff] %v332
        %368 = vst [vmem:[#allocation2 + $0xd0] sm:$0xff] %v332
        %369 = vst [vmem:[#allocation2 + $0xd8] sm:$0xff] %v332
        %370 = vst [vmem:[#allocation2 + $0xe0] sm:$0xff] %v333
        %371 = vst [vmem:[#allocation2 + $0xe8] sm:$0xff] %v333
        %372 = vst [vmem:[#allocation2 + $0xf0] sm:$0xff] %v333
        %373 = vst [vmem:[#allocation2 + $0xf8] sm:$0xff] %v333
        %374 = vst [vmem:[#allocation2 + $0x100] sm:$0xff] %v334
        %375 = vst [vmem:[#allocation2 + $0x108] sm:$0xff] %v334
        %376 = vst [vmem:[#allocation2 + $0x110] sm:$0xff] %v334
        %377 = vst [vmem:[#allocation2 + $0x118] sm:$0xff] %v334
        %378 = vst [vmem:[#allocation2 + $0x120] sm:$0xff] %v335
        %379 = vst [vmem:[#allocation2 + $0x128] sm:$0xff] %v335
        %380 = vst [vmem:[#allocation2 + $0x130] sm:$0xff] %v335
        %381 = vst [vmem:[#allocation2 + $0x138] sm:$0xff] %v335
        %382 = vst [vmem:[#allocation2 + $0x140] sm:$0xff] %v336
        %383 = vst [vmem:[#allocation2 + $0x148] sm:$0xff] %v336
        %384 = vst [vmem:[#allocation2 + $0x150] sm:$0xff] %v336
        %385 = vst [vmem:[#allocation2 + $0x158] sm:$0xff] %v336
        %386 = vst [vmem:[#allocation2 + $0x160] sm:$0xff] %v337
        %387 = vst [vmem:[#allocation2 + $0x168] sm:$0xff] %v337
        %388 = vst [vmem:[#allocation2 + $0x170] sm:$0xff] %v337
        %389 = vst [vmem:[#allocation2 + $0x178] sm:$0xff] %v337
        %390 = vst [vmem:[#allocation2 + $0x180] sm:$0xff] %v338
        %391 = vst [vmem:[#allocation2 + $0x188] sm:$0xff] %v338
        %392 = vst [vmem:[#allocation2 + $0x190] sm:$0xff] %v338
        %393 = vst [vmem:[#allocation2 + $0x198] sm:$0xff] %v338
        %394 = vst [vmem:[#allocation2 + $0x1a0] sm:$0xff] %v339
        %395 = vst [vmem:[#allocation2 + $0x1a8] sm:$0xff] %v339
        %396 = vst [vmem:[#allocation2 + $0x1b0] sm:$0xff] %v339
        %397 = vst [vmem:[#allocation2 + $0x1b8] sm:$0xff] %v339
        %398 = vst [vmem:[#allocation2 + $0x1c0] sm:$0xff] %v340
        %399 = vst [vmem:[#allocation2 + $0x1c8] sm:$0xff] %v340
        %400 = vst [vmem:[#allocation2 + $0x1d0] sm:$0xff] %v340
        %401 = vst [vmem:[#allocation2 + $0x1d8] sm:$0xff] %v340
        %402 = vst [vmem:[#allocation2 + $0x1e0] sm:$0xff] %v341
        %403 = vst [vmem:[#allocation2 + $0x1e8] sm:$0xff] %v341
        %404 = vst [vmem:[#allocation2 + $0x1f0] sm:$0xff] %v341
        %405 = vst [vmem:[#allocation2 + $0x1f8] sm:$0xff] %v341
      $region44: #{gcn_conv.3} parent=39 // pred_fallthru
        _
      %v406 = vld [vmem:[%s306] sm:$0xf]
      %v407 = vld [vmem:[%s306 + $0x4] sm:$0xf]
      %v408 = vld [vmem:[%s306 + $0x8] sm:$0xf]
      %v409 = vld [vmem:[%s306 + $0xc] sm:$0xf]
      %v410 = vld [vmem:[%s306 + $0x10] sm:$0xf]
      %v411 = vld [vmem:[%s306 + $0x14] sm:$0xf]
      %v412 = vld [vmem:[%s306 + $0x18] sm:$0xf]
      %v413 = vld [vmem:[%s306 + $0x1c] sm:$0xf]
      %v414 = vld [vmem:[%s306 + $0x20] sm:$0xf]
      %v415 = vld [vmem:[%s306 + $0x24] sm:$0xf]
      %v416 = vld [vmem:[%s306 + $0x28] sm:$0xf]
      %v417 = vld [vmem:[%s306 + $0x2c] sm:$0xf]
      %v418 = vld [vmem:[%s306 + $0x30] sm:$0xf]
      %v419 = vld [vmem:[%s306 + $0x34] sm:$0xf]
      %v420 = vld [vmem:[%s306 + $0x38] sm:$0xf]
      %v421 = vld [vmem:[%s306 + $0x3c] sm:$0xf]
      %v422 = vld [vmem:[%s306 + $0x40] sm:$0xf]
      %v423 = vld [vmem:[%s306 + $0x44] sm:$0xf]
      %v424 = vld [vmem:[%s306 + $0x48] sm:$0xf]
      %v425 = vld [vmem:[%s306 + $0x4c] sm:$0xf]
      %v426 = vld [vmem:[%s306 + $0x50] sm:$0xf]
      %v427 = vld [vmem:[%s306 + $0x54] sm:$0xf]
      %v428 = vld [vmem:[%s306 + $0x58] sm:$0xf]
      %v429 = vld [vmem:[%s306 + $0x5c] sm:$0xf]
      %v430 = vld [vmem:[%s306 + $0x60] sm:$0xf]
      %v431 = vld [vmem:[%s306 + $0x64] sm:$0xf]
      %v432 = vld [vmem:[%s306 + $0x68] sm:$0xf]
      %v433 = vld [vmem:[%s306 + $0x6c] sm:$0xf]
      %v434 = vld [vmem:[%s306 + $0x70] sm:$0xf]
      %v435 = vld [vmem:[%s306 + $0x74] sm:$0xf]
      %v436 = vld [vmem:[%s306 + $0x78] sm:$0xf]
      %v437 = vld [vmem:[%s306 + $0x7c] sm:$0xf]
      %v438 = vld [vmem:[%s306 + $0x80] sm:$0xf]
      %v439 = vld [vmem:[%s306 + $0x84] sm:$0xf]
      %v440 = vld [vmem:[%s306 + $0x88] sm:$0xf]
      %v441 = vld [vmem:[%s306 + $0x8c] sm:$0xf]
      %v442 = vld [vmem:[%s306 + $0x90] sm:$0xf]
      %v443 = vld [vmem:[%s306 + $0x94] sm:$0xf]
      %v444 = vld [vmem:[%s306 + $0x98] sm:$0xf]
      %v445 = vld [vmem:[%s306 + $0x9c] sm:$0xf]
      %v446 = vld [vmem:[%s306 + $0xa0] sm:$0xf]
      %v447 = vld [vmem:[%s306 + $0xa4] sm:$0xf]
      %v448 = vld [vmem:[%s306 + $0xa8] sm:$0xf]
      %v449 = vld [vmem:[%s306 + $0xac] sm:$0xf]
      %v450 = vld [vmem:[%s306 + $0xb0] sm:$0xf]
      %v451 = vld [vmem:[%s306 + $0xb4] sm:$0xf]
      %v452 = vld [vmem:[%s306 + $0xb8] sm:$0xf]
      %v453 = vld [vmem:[%s306 + $0xbc] sm:$0xf]
      %v454 = vld [vmem:[%s306 + $0xc0] sm:$0xf]
      %v455 = vld [vmem:[%s306 + $0xc4] sm:$0xf]
      %v456 = vld [vmem:[%s306 + $0xc8] sm:$0xf]
      %v457 = vld [vmem:[%s306 + $0xcc] sm:$0xf]
      %v458 = vld [vmem:[%s306 + $0xd0] sm:$0xf]
      %v459 = vld [vmem:[%s306 + $0xd4] sm:$0xf]
      %v460 = vld [vmem:[%s306 + $0xd8] sm:$0xf]
      %v461 = vld [vmem:[%s306 + $0xdc] sm:$0xf]
      %v462 = vld [vmem:[%s306 + $0xe0] sm:$0xf]
      %v463 = vld [vmem:[%s306 + $0xe4] sm:$0xf]
      %v464 = vld [vmem:[%s306 + $0xe8] sm:$0xf]
      %v465 = vld [vmem:[%s306 + $0xec] sm:$0xf]
      %v466 = vld [vmem:[%s306 + $0xf0] sm:$0xf]
      %v467 = vld [vmem:[%s306 + $0xf4] sm:$0xf]
      %v468 = vld [vmem:[%s306 + $0xf8] sm:$0xf]
      %v469 = vld [vmem:[%s306 + $0xfc] sm:$0xf]
      %v470 = vmax.bf16 %v406, 0
      %v471 = vmax.bf16 %v407, 0
      %v472 = vmax.bf16 %v408, 0
      %v473 = vmax.bf16 %v409, 0
      %v474 = vmax.bf16 %v410, 0
      %v475 = vmax.bf16 %v411, 0
      %v476 = vmax.bf16 %v412, 0
      %v477 = vmax.bf16 %v413, 0
      %v478 = vmax.bf16 %v414, 0
      %v479 = vmax.bf16 %v415, 0
      %v480 = vmax.bf16 %v416, 0
      %v481 = vmax.bf16 %v417, 0
      %v482 = vmax.bf16 %v418, 0
      %v483 = vmax.bf16 %v419, 0
      %v484 = vmax.bf16 %v420, 0
      %v485 = vmax.bf16 %v421, 0
      %v486 = vmax.bf16 %v422, 0
      %v487 = vmax.bf16 %v423, 0
      %v488 = vmax.bf16 %v424, 0
      %v489 = vmax.bf16 %v425, 0
      %v490 = vmax.bf16 %v426, 0
      %v491 = vmax.bf16 %v427, 0
      %v492 = vmax.bf16 %v428, 0
      %v493 = vmax.bf16 %v429, 0
      %v494 = vmax.bf16 %v430, 0
      %v495 = vmax.bf16 %v431, 0
      %v496 = vmax.bf16 %v432, 0
      %v497 = vmax.bf16 %v433, 0
      %v498 = vmax.bf16 %v434, 0
      %v499 = vmax.bf16 %v435, 0
      %v500 = vmax.bf16 %v436, 0
      %v501 = vmax.bf16 %v437, 0
      %v502 = vmax.bf16 %v438, 0
      %v503 = vmax.bf16 %v439, 0
      %v504 = vmax.bf16 %v440, 0
      %v505 = vmax.bf16 %v441, 0
      %v506 = vmax.bf16 %v442, 0
      %v507 = vmax.bf16 %v443, 0
      %v508 = vmax.bf16 %v444, 0
      %v509 = vmax.bf16 %v445, 0
      %v510 = vmax.bf16 %v446, 0
      %v511 = vmax.bf16 %v447, 0
      %v512 = vmax.bf16 %v448, 0
      %v513 = vmax.bf16 %v449, 0
      %v514 = vmax.bf16 %v450, 0
      %v515 = vmax.bf16 %v451, 0
      %v516 = vmax.bf16 %v452, 0
      %v517 = vmax.bf16 %v453, 0
      %v518 = vmax.bf16 %v454, 0
      %v519 = vmax.bf16 %v455, 0
      %v520 = vmax.bf16 %v456, 0
      %v521 = vmax.bf16 %v457, 0
      %v522 = vmax.bf16 %v458, 0
      %v523 = vmax.bf16 %v459, 0
      %v524 = vmax.bf16 %v460, 0
      %v525 = vmax.bf16 %v461, 0
      %v526 = vmax.bf16 %v462, 0
      %v527 = vmax.bf16 %v463, 0
      %v528 = vmax.bf16 %v464, 0
      %v529 = vmax.bf16 %v465, 0
      %v530 = vmax.bf16 %v466, 0
      %v531 = vmax.bf16 %v467, 0
      %v532 = vmax.bf16 %v468, 0
      %v533 = vmax.bf16 %v469, 0
      %v534 = vld [vmem:[%s311] sm:$0xf]
      %v535 = vld [vmem:[#allocation2] sm:$0xff]
      %v536 = vld [vmem:[#allocation2 + $0x8] sm:$0xff]
      %v537 = vld [vmem:[#allocation2 + $0x10] sm:$0xff]
      %v538 = vld [vmem:[#allocation2 + $0x18] sm:$0xff]
      %v539 = vld [vmem:[#allocation2 + $0x20] sm:$0xff]
      %v540 = vld [vmem:[#allocation2 + $0x28] sm:$0xff]
      %v541 = vld [vmem:[#allocation2 + $0x30] sm:$0xff]
      %v542 = vld [vmem:[#allocation2 + $0x38] sm:$0xff]
      %v543 = vld [vmem:[#allocation2 + $0x40] sm:$0xff]
      %v544 = vld [vmem:[#allocation2 + $0x48] sm:$0xff]
      %v545 = vld [vmem:[#allocation2 + $0x50] sm:$0xff]
      %v546 = vld [vmem:[#allocation2 + $0x58] sm:$0xff]
      %v547 = vld [vmem:[#allocation2 + $0x60] sm:$0xff]
      %v548 = vld [vmem:[#allocation2 + $0x68] sm:$0xff]
      %v549 = vld [vmem:[#allocation2 + $0x70] sm:$0xff]
      %v550 = vld [vmem:[#allocation2 + $0x78] sm:$0xff]
      %v551 = vld [vmem:[#allocation2 + $0x80] sm:$0xff]
      %v552 = vld [vmem:[#allocation2 + $0x88] sm:$0xff]
      %v553 = vld [vmem:[#allocation2 + $0x90] sm:$0xff]
      %v554 = vld [vmem:[#allocation2 + $0x98] sm:$0xff]
      %v555 = vld [vmem:[#allocation2 + $0xa0] sm:$0xff]
      %v556 = vld [vmem:[#allocation2 + $0xa8] sm:$0xff]
      %v557 = vld [vmem:[#allocation2 + $0xb0] sm:$0xff]
      %v558 = vld [vmem:[#allocation2 + $0xb8] sm:$0xff]
      %v559 = vld [vmem:[#allocation2 + $0xc0] sm:$0xff]
      %v560 = vld [vmem:[#allocation2 + $0xc8] sm:$0xff]
      %v561 = vld [vmem:[#allocation2 + $0xd0] sm:$0xff]
      %v562 = vld [vmem:[#allocation2 + $0xd8] sm:$0xff]
      %v563 = vld [vmem:[#allocation2 + $0xe0] sm:$0xff]
      %v564 = vld [vmem:[#allocation2 + $0xe8] sm:$0xff]
      %v565 = vld [vmem:[#allocation2 + $0xf0] sm:$0xff]
      %v566 = vld [vmem:[#allocation2 + $0xf8] sm:$0xff]
      %v567 = vld [vmem:[#allocation2 + $0x100] sm:$0xff]
      %v568 = vld [vmem:[#allocation2 + $0x108] sm:$0xff]
      %v569 = vld [vmem:[#allocation2 + $0x110] sm:$0xff]
      %v570 = vld [vmem:[#allocation2 + $0x118] sm:$0xff]
      %v571 = vld [vmem:[#allocation2 + $0x120] sm:$0xff]
      %v572 = vld [vmem:[#allocation2 + $0x128] sm:$0xff]
      %v573 = vld [vmem:[#allocation2 + $0x130] sm:$0xff]
      %v574 = vld [vmem:[#allocation2 + $0x138] sm:$0xff]
      %v575 = vld [vmem:[#allocation2 + $0x140] sm:$0xff]
      %v576 = vld [vmem:[#allocation2 + $0x148] sm:$0xff]
      %v577 = vld [vmem:[#allocation2 + $0x150] sm:$0xff]
      %v578 = vld [vmem:[#allocation2 + $0x158] sm:$0xff]
      %v579 = vld [vmem:[#allocation2 + $0x160] sm:$0xff]
      %v580 = vld [vmem:[#allocation2 + $0x168] sm:$0xff]
      %v581 = vld [vmem:[#allocation2 + $0x170] sm:$0xff]
      %v582 = vld [vmem:[#allocation2 + $0x178] sm:$0xff]
      %v583 = vld [vmem:[#allocation2 + $0x180] sm:$0xff]
      %v584 = vld [vmem:[#allocation2 + $0x188] sm:$0xff]
      %v585 = vld [vmem:[#allocation2 + $0x190] sm:$0xff]
      %v586 = vld [vmem:[#allocation2 + $0x198] sm:$0xff]
      %v587 = vld [vmem:[#allocation2 + $0x1a0] sm:$0xff]
      %v588 = vld [vmem:[#allocation2 + $0x1a8] sm:$0xff]
      %v589 = vld [vmem:[#allocation2 + $0x1b0] sm:$0xff]
      %v590 = vld [vmem:[#allocation2 + $0x1b8] sm:$0xff]
      %v591 = vld [vmem:[#allocation2 + $0x1c0] sm:$0xff]
      %v592 = vld [vmem:[#allocation2 + $0x1c8] sm:$0xff]
      %v593 = vld [vmem:[#allocation2 + $0x1d0] sm:$0xff]
      %v594 = vld [vmem:[#allocation2 + $0x1d8] sm:$0xff]
      %v595 = vld [vmem:[#allocation2 + $0x1e0] sm:$0xff]
      %v596 = vld [vmem:[#allocation2 + $0x1e8] sm:$0xff]
      %v597 = vld [vmem:[#allocation2 + $0x1f0] sm:$0xff]
      %v598 = vld [vmem:[#allocation2 + $0x1f8] sm:$0xff]
      %v599 = vlaneseq
      %v600 = vshrl.u32 %v599, 7
      %v601 = vsub.s32 0, %v600
      %v602 = vrot.slane %v534, %v601
      %v603 = vlaneseq
      %v604 = vshrl.u32 %v603, 7
      %v605 = vsub.s32 1, %v604
      %v606 = vrot.slane %v534, %v605
      %v607 = vlaneseq
      %v608 = vshrl.u32 %v607, 7
      %v609 = vsub.s32 2, %v608
      %v610 = vrot.slane %v534, %v609
      %v611 = vlaneseq
      %v612 = vshrl.u32 %v611, 7
      %v613 = vsub.s32 3, %v612
      %v614 = vrot.slane %v534, %v613
      %vm615 = vcmp.eq.s32.totalorder %v602, %v535
      %vm616 = vcmp.eq.s32.totalorder %v606, %v536
      %vm617 = vcmp.eq.s32.totalorder %v610, %v537
      %vm618 = vcmp.eq.s32.totalorder %v614, %v538
      %vm619 = vcmp.eq.s32.totalorder %v602, %v539
      %vm620 = vcmp.eq.s32.totalorder %v606, %v540
      %vm621 = vcmp.eq.s32.totalorder %v610, %v541
      %vm622 = vcmp.eq.s32.totalorder %v614, %v542
      %vm623 = vcmp.eq.s32.totalorder %v602, %v543
      %vm624 = vcmp.eq.s32.totalorder %v606, %v544
      %vm625 = vcmp.eq.s32.totalorder %v610, %v545
      %vm626 = vcmp.eq.s32.totalorder %v614, %v546
      %vm627 = vcmp.eq.s32.totalorder %v602, %v547
      %vm628 = vcmp.eq.s32.totalorder %v606, %v548
      %vm629 = vcmp.eq.s32.totalorder %v610, %v549
      %vm630 = vcmp.eq.s32.totalorder %v614, %v550
      %vm631 = vcmp.eq.s32.totalorder %v602, %v551
      %vm632 = vcmp.eq.s32.totalorder %v606, %v552
      %vm633 = vcmp.eq.s32.totalorder %v610, %v553
      %vm634 = vcmp.eq.s32.totalorder %v614, %v554
      %vm635 = vcmp.eq.s32.totalorder %v602, %v555
      %vm636 = vcmp.eq.s32.totalorder %v606, %v556
      %vm637 = vcmp.eq.s32.totalorder %v610, %v557
      %vm638 = vcmp.eq.s32.totalorder %v614, %v558
      %vm639 = vcmp.eq.s32.totalorder %v602, %v559
      %vm640 = vcmp.eq.s32.totalorder %v606, %v560
      %vm641 = vcmp.eq.s32.totalorder %v610, %v561
      %vm642 = vcmp.eq.s32.totalorder %v614, %v562
      %vm643 = vcmp.eq.s32.totalorder %v602, %v563
      %vm644 = vcmp.eq.s32.totalorder %v606, %v564
      %vm645 = vcmp.eq.s32.totalorder %v610, %v565
      %vm646 = vcmp.eq.s32.totalorder %v614, %v566
      %vm647 = vcmp.eq.s32.totalorder %v602, %v567
      %vm648 = vcmp.eq.s32.totalorder %v606, %v568
      %vm649 = vcmp.eq.s32.totalorder %v610, %v569
      %vm650 = vcmp.eq.s32.totalorder %v614, %v570
      %vm651 = vcmp.eq.s32.totalorder %v602, %v571
      %vm652 = vcmp.eq.s32.totalorder %v606, %v572
      %vm653 = vcmp.eq.s32.totalorder %v610, %v573
      %vm654 = vcmp.eq.s32.totalorder %v614, %v574
      %vm655 = vcmp.eq.s32.totalorder %v602, %v575
      %vm656 = vcmp.eq.s32.totalorder %v606, %v576
      %vm657 = vcmp.eq.s32.totalorder %v610, %v577
      %vm658 = vcmp.eq.s32.totalorder %v614, %v578
      %vm659 = vcmp.eq.s32.totalorder %v602, %v579
      %vm660 = vcmp.eq.s32.totalorder %v606, %v580
      %vm661 = vcmp.eq.s32.totalorder %v610, %v581
      %vm662 = vcmp.eq.s32.totalorder %v614, %v582
      %vm663 = vcmp.eq.s32.totalorder %v602, %v583
      %vm664 = vcmp.eq.s32.totalorder %v606, %v584
      %vm665 = vcmp.eq.s32.totalorder %v610, %v585
      %vm666 = vcmp.eq.s32.totalorder %v614, %v586
      %vm667 = vcmp.eq.s32.totalorder %v602, %v587
      %vm668 = vcmp.eq.s32.totalorder %v606, %v588
      %vm669 = vcmp.eq.s32.totalorder %v610, %v589
      %vm670 = vcmp.eq.s32.totalorder %v614, %v590
      %vm671 = vcmp.eq.s32.totalorder %v602, %v591
      %vm672 = vcmp.eq.s32.totalorder %v606, %v592
      %vm673 = vcmp.eq.s32.totalorder %v610, %v593
      %vm674 = vcmp.eq.s32.totalorder %v614, %v594
      %vm675 = vcmp.eq.s32.totalorder %v602, %v595
      %vm676 = vcmp.eq.s32.totalorder %v606, %v596
      %vm677 = vcmp.eq.s32.totalorder %v610, %v597
      %vm678 = vcmp.eq.s32.totalorder %v614, %v598
      %v679 = vsel %vm615, 1.0, 0.0
      %v680 = vsel %vm616, 1.0, 0.0
      %v681 = vsel %vm617, 1.0, 0.0
      %v682 = vsel %vm618, 1.0, 0.0
      %v683 = vsel %vm619, 1.0, 0.0
      %v684 = vsel %vm620, 1.0, 0.0
      %v685 = vsel %vm621, 1.0, 0.0
      %v686 = vsel %vm622, 1.0, 0.0
      %v687 = vsel %vm623, 1.0, 0.0
      %v688 = vsel %vm624, 1.0, 0.0
      %v689 = vsel %vm625, 1.0, 0.0
      %v690 = vsel %vm626, 1.0, 0.0
      %v691 = vsel %vm627, 1.0, 0.0
      %v692 = vsel %vm628, 1.0, 0.0
      %v693 = vsel %vm629, 1.0, 0.0
      %v694 = vsel %vm630, 1.0, 0.0
      %v695 = vsel %vm631, 1.0, 0.0
      %v696 = vsel %vm632, 1.0, 0.0
      %v697 = vsel %vm633, 1.0, 0.0
      %v698 = vsel %vm634, 1.0, 0.0
      %v699 = vsel %vm635, 1.0, 0.0
      %v700 = vsel %vm636, 1.0, 0.0
      %v701 = vsel %vm637, 1.0, 0.0
      %v702 = vsel %vm638, 1.0, 0.0
      %v703 = vsel %vm639, 1.0, 0.0
      %v704 = vsel %vm640, 1.0, 0.0
      %v705 = vsel %vm641, 1.0, 0.0
      %v706 = vsel %vm642, 1.0, 0.0
      %v707 = vsel %vm643, 1.0, 0.0
      %v708 = vsel %vm644, 1.0, 0.0
      %v709 = vsel %vm645, 1.0, 0.0
      %v710 = vsel %vm646, 1.0, 0.0
      %v711 = vsel %vm647, 1.0, 0.0
      %v712 = vsel %vm648, 1.0, 0.0
      %v713 = vsel %vm649, 1.0, 0.0
      %v714 = vsel %vm650, 1.0, 0.0
      %v715 = vsel %vm651, 1.0, 0.0
      %v716 = vsel %vm652, 1.0, 0.0
      %v717 = vsel %vm653, 1.0, 0.0
      %v718 = vsel %vm654, 1.0, 0.0
      %v719 = vsel %vm655, 1.0, 0.0
      %v720 = vsel %vm656, 1.0, 0.0
      %v721 = vsel %vm657, 1.0, 0.0
      %v722 = vsel %vm658, 1.0, 0.0
      %v723 = vsel %vm659, 1.0, 0.0
      %v724 = vsel %vm660, 1.0, 0.0
      %v725 = vsel %vm661, 1.0, 0.0
      %v726 = vsel %vm662, 1.0, 0.0
      %v727 = vsel %vm663, 1.0, 0.0
      %v728 = vsel %vm664, 1.0, 0.0
      %v729 = vsel %vm665, 1.0, 0.0
      %v730 = vsel %vm666, 1.0, 0.0
      %v731 = vsel %vm667, 1.0, 0.0
      %v732 = vsel %vm668, 1.0, 0.0
      %v733 = vsel %vm669, 1.0, 0.0
      %v734 = vsel %vm670, 1.0, 0.0
      %v735 = vsel %vm671, 1.0, 0.0
      %v736 = vsel %vm672, 1.0, 0.0
      %v737 = vsel %vm673, 1.0, 0.0
      %v738 = vsel %vm674, 1.0, 0.0
      %v739 = vsel %vm675, 1.0, 0.0
      %v740 = vsel %vm676, 1.0, 0.0
      %v741 = vsel %vm677, 1.0, 0.0
      %v742 = vsel %vm678, 1.0, 0.0
      %v743 = vpack.c.bf16 %v683, %v679
      %v744 = vpack.c.bf16 %v684, %v680
      %v745 = vpack.c.bf16 %v685, %v681
      %v746 = vpack.c.bf16 %v686, %v682
      %v747 = vpack.c.bf16 %v691, %v687
      %v748 = vpack.c.bf16 %v692, %v688
      %v749 = vpack.c.bf16 %v693, %v689
      %v750 = vpack.c.bf16 %v694, %v690
      %v751 = vpack.c.bf16 %v699, %v695
      %v752 = vpack.c.bf16 %v700, %v696
      %v753 = vpack.c.bf16 %v701, %v697
      %v754 = vpack.c.bf16 %v702, %v698
      %v755 = vpack.c.bf16 %v707, %v703
      %v756 = vpack.c.bf16 %v708, %v704
      %v757 = vpack.c.bf16 %v709, %v705
      %v758 = vpack.c.bf16 %v710, %v706
      %v759 = vpack.c.bf16 %v715, %v711
      %v760 = vpack.c.bf16 %v716, %v712
      %v761 = vpack.c.bf16 %v717, %v713
      %v762 = vpack.c.bf16 %v718, %v714
      %v763 = vpack.c.bf16 %v723, %v719
      %v764 = vpack.c.bf16 %v724, %v720
      %v765 = vpack.c.bf16 %v725, %v721
      %v766 = vpack.c.bf16 %v726, %v722
      %v767 = vpack.c.bf16 %v731, %v727
      %v768 = vpack.c.bf16 %v732, %v728
      %v769 = vpack.c.bf16 %v733, %v729
      %v770 = vpack.c.bf16 %v734, %v730
      %v771 = vpack.c.bf16 %v739, %v735
      %v772 = vpack.c.bf16 %v740, %v736
      %v773 = vpack.c.bf16 %v741, %v737
      %v774 = vpack.c.bf16 %v742, %v738
      %v839 = vunpack.c.l.b16 %v470
      %v840 = vunpack.c.l.b16 %v471
      %v841 = vunpack.c.l.b16 %v472
      %v842 = vunpack.c.l.b16 %v473
      %v843 = vunpack.c.l.b16 %v474
      %v844 = vunpack.c.l.b16 %v475
      %v845 = vunpack.c.l.b16 %v476
      %v846 = vunpack.c.l.b16 %v477
      %v847 = vunpack.c.l.b16 %v478
      %v848 = vunpack.c.l.b16 %v479
      %v849 = vunpack.c.l.b16 %v480
      %v850 = vunpack.c.l.b16 %v481
      %v851 = vunpack.c.l.b16 %v482
      %v852 = vunpack.c.l.b16 %v483
      %v853 = vunpack.c.l.b16 %v484
      %v854 = vunpack.c.l.b16 %v485
      %v855 = vunpack.c.l.b16 %v486
      %v856 = vunpack.c.l.b16 %v487
      %v857 = vunpack.c.l.b16 %v488
      %v858 = vunpack.c.l.b16 %v489
      %v859 = vunpack.c.l.b16 %v490
      %v860 = vunpack.c.l.b16 %v491
      %v861 = vunpack.c.l.b16 %v492
      %v862 = vunpack.c.l.b16 %v493
      %v863 = vunpack.c.l.b16 %v494
      %v864 = vunpack.c.l.b16 %v495
      %v865 = vunpack.c.l.b16 %v496
      %v866 = vunpack.c.l.b16 %v497
      %v867 = vunpack.c.l.b16 %v498
      %v868 = vunpack.c.l.b16 %v499
      %v869 = vunpack.c.l.b16 %v500
      %v870 = vunpack.c.l.b16 %v501
      %v871 = vunpack.c.l.b16 %v502
      %v872 = vunpack.c.l.b16 %v503
      %v873 = vunpack.c.l.b16 %v504
      %v874 = vunpack.c.l.b16 %v505
      %v875 = vunpack.c.l.b16 %v506
      %v876 = vunpack.c.l.b16 %v507
      %v877 = vunpack.c.l.b16 %v508
      %v878 = vunpack.c.l.b16 %v509
      %v879 = vunpack.c.l.b16 %v510
      %v880 = vunpack.c.l.b16 %v511
      %v881 = vunpack.c.l.b16 %v512
      %v882 = vunpack.c.l.b16 %v513
      %v883 = vunpack.c.l.b16 %v514
      %v884 = vunpack.c.l.b16 %v515
      %v885 = vunpack.c.l.b16 %v516
      %v886 = vunpack.c.l.b16 %v517
      %v887 = vunpack.c.l.b16 %v518
      %v888 = vunpack.c.l.b16 %v519
      %v889 = vunpack.c.l.b16 %v520
      %v890 = vunpack.c.l.b16 %v521
      %v891 = vunpack.c.l.b16 %v522
      %v892 = vunpack.c.l.b16 %v523
      %v893 = vunpack.c.l.b16 %v524
      %v894 = vunpack.c.l.b16 %v525
      %v895 = vunpack.c.l.b16 %v526
      %v896 = vunpack.c.l.b16 %v527
      %v897 = vunpack.c.l.b16 %v528
      %v898 = vunpack.c.l.b16 %v529
      %v899 = vunpack.c.l.b16 %v530
      %v900 = vunpack.c.l.b16 %v531
      %v901 = vunpack.c.l.b16 %v532
      %v902 = vunpack.c.l.b16 %v533
      %v903 = vpack.c.b16 %v840, %v839
      %v904 = vpack.c.b16 %v842, %v841
      %v905 = vpack.c.b16 %v844, %v843
      %v906 = vpack.c.b16 %v846, %v845
      %v907 = vpack.c.b16 %v848, %v847
      %v908 = vpack.c.b16 %v850, %v849
      %v909 = vpack.c.b16 %v852, %v851
      %v910 = vpack.c.b16 %v854, %v853
      %v911 = vpack.c.b16 %v856, %v855
      %v912 = vpack.c.b16 %v858, %v857
      %v913 = vpack.c.b16 %v860, %v859
      %v914 = vpack.c.b16 %v862, %v861
      %v915 = vpack.c.b16 %v864, %v863
      %v916 = vpack.c.b16 %v866, %v865
      %v917 = vpack.c.b16 %v868, %v867
      %v918 = vpack.c.b16 %v870, %v869
      %v919 = vpack.c.b16 %v872, %v871
      %v920 = vpack.c.b16 %v874, %v873
      %v921 = vpack.c.b16 %v876, %v875
      %v922 = vpack.c.b16 %v878, %v877
      %v923 = vpack.c.b16 %v880, %v879
      %v924 = vpack.c.b16 %v882, %v881
      %v925 = vpack.c.b16 %v884, %v883
      %v926 = vpack.c.b16 %v886, %v885
      %v927 = vpack.c.b16 %v888, %v887
      %v928 = vpack.c.b16 %v890, %v889
      %v929 = vpack.c.b16 %v892, %v891
      %v930 = vpack.c.b16 %v894, %v893
      %v931 = vpack.c.b16 %v896, %v895
      %v932 = vpack.c.b16 %v898, %v897
      %v933 = vpack.c.b16 %v900, %v899
      %v934 = vpack.c.b16 %v902, %v901
      %967 = vmatprep.subr.bf16.mxu0 0
      %968 = vmatpush1.bf16.msra.mxu0 %v910
      %969 = vmatprep.subr.bf16.mxu0 0
      %970 = vmatpush1.bf16.msra.mxu0 %v909
      %971 = vmatprep.subr.bf16.mxu0 0
      %972 = vmatpush1.bf16.msra.mxu0 %v908
      %973 = vmatprep.subr.bf16.mxu0 0
      %974 = vmatpush1.bf16.msra.mxu0 %v907
      %975 = vmatprep.subr.bf16.mxu0 0
      %976 = vmatpush1.bf16.msra.mxu0 %v906
      %977 = vmatprep.subr.bf16.mxu0 0
      %978 = vmatpush1.bf16.msra.mxu0 %v905
      %979 = vmatprep.subr.bf16.mxu0 0
      %980 = vmatpush1.bf16.msra.mxu0 %v904
      %981 = vmatprep.subr.bf16.mxu0 0
      %982 = vmatpush1.bf16.msra.mxu0 %v903
      %983 = vmatprep.subr.bf16.mxu0 0
      %984 = vmatpush2.bf16.msra.mxu0 %v918
      %985 = vmatprep.subr.bf16.mxu0 0
      %986 = vmatpush2.bf16.msra.mxu0 %v917
      %987 = vmatprep.subr.bf16.mxu0 0
      %988 = vmatpush2.bf16.msra.mxu0 %v916
      %989 = vmatprep.subr.bf16.mxu0 0
      %990 = vmatpush2.bf16.msra.mxu0 %v915
      %991 = vmatprep.subr.bf16.mxu0 0
      %992 = vmatpush2.bf16.msra.mxu0 %v914
      %993 = vmatprep.subr.bf16.mxu0 0
      %994 = vmatpush2.bf16.msra.mxu0 %v913
      %995 = vmatprep.subr.bf16.mxu0 0
      %996 = vmatpush2.bf16.msra.mxu0 %v912
      %997 = vmatprep.subr.bf16.mxu0 0
      %998 = vmatpush2.bf16.msra.mxu0 %v911
      %999 = vmatprep.mubr.bf16.mxu0 %v744
      %1000 = vmatmul.mubr.bf16.gmra.mxu0 %v743
      %v1001 = vpop.f32.mrf.mxu0
      %v1002 = vadd.f32 0.0, %v1001
      %v1003 = vpop.f32.mrf.mxu0
      %v1004 = vpop.f32.mrf.mxu0
      %v1005 = vadd.f32 0.0, %v1004
      %v1006 = vpop.f32.mrf.mxu0
      %1007 = vmatprep.mubr.bf16.mxu0 %v748
      %1008 = vmatmul.mubr.bf16.gmra.mxu0 %v747
      %v1009 = vpop.f32.mrf.mxu0
      %v1010 = vadd.f32 0.0, %v1009
      %v1011 = vpop.f32.mrf.mxu0
      %v1012 = vpop.f32.mrf.mxu0
      %v1013 = vadd.f32 0.0, %v1012
      %v1014 = vpop.f32.mrf.mxu0
      %1015 = vmatprep.mubr.bf16.mxu0 %v752
      %1016 = vmatmul.mubr.bf16.gmra.mxu0 %v751
      %v1017 = vpop.f32.mrf.mxu0
      %v1018 = vadd.f32 0.0, %v1017
      %v1019 = vpop.f32.mrf.mxu0
      %v1020 = vpop.f32.mrf.mxu0
      %v1021 = vadd.f32 0.0, %v1020
      %v1022 = vpop.f32.mrf.mxu0
      %1023 = vmatprep.mubr.bf16.mxu0 %v756
      %1024 = vmatmul.mubr.bf16.gmra.mxu0 %v755
      %v1025 = vpop.f32.mrf.mxu0
      %v1026 = vadd.f32 0.0, %v1025
      %v1027 = vpop.f32.mrf.mxu0
      %v1028 = vpop.f32.mrf.mxu0
      %v1029 = vadd.f32 0.0, %v1028
      %v1030 = vpop.f32.mrf.mxu0
      %1031 = vmatprep.mubr.bf16.mxu0 %v760
      %1032 = vmatmul.mubr.bf16.gmra.mxu0 %v759
      %v1033 = vpop.f32.mrf.mxu0
      %v1034 = vadd.f32 0.0, %v1033
      %v1035 = vpop.f32.mrf.mxu0
      %v1036 = vpop.f32.mrf.mxu0
      %v1037 = vadd.f32 0.0, %v1036
      %v1038 = vpop.f32.mrf.mxu0
      %1039 = vmatprep.mubr.bf16.mxu0 %v764
      %1040 = vmatmul.mubr.bf16.gmra.mxu0 %v763
      %v1041 = vpop.f32.mrf.mxu0
      %v1042 = vadd.f32 0.0, %v1041
      %v1043 = vpop.f32.mrf.mxu0
      %v1044 = vpop.f32.mrf.mxu0
      %v1045 = vadd.f32 0.0, %v1044
      %v1046 = vpop.f32.mrf.mxu0
      %1047 = vmatprep.mubr.bf16.mxu0 %v768
      %1048 = vmatmul.mubr.bf16.gmra.mxu0 %v767
      %v1049 = vpop.f32.mrf.mxu0
      %v1050 = vadd.f32 0.0, %v1049
      %v1051 = vpop.f32.mrf.mxu0
      %v1052 = vpop.f32.mrf.mxu0
      %v1053 = vadd.f32 0.0, %v1052
      %v1054 = vpop.f32.mrf.mxu0
      %1055 = vmatprep.mubr.bf16.mxu0 %v772
      %1056 = vmatmul.mubr.bf16.gmra.mxu0 %v771
      %v1057 = vpop.f32.mrf.mxu0
      %v1058 = vadd.f32 0.0, %v1057
      %v1059 = vpop.f32.mrf.mxu0
      %v1060 = vpop.f32.mrf.mxu0
      %v1061 = vadd.f32 0.0, %v1060
      %v1062 = vpop.f32.mrf.mxu0
      %1063 = vdwg.mxu0
      %1064 = vmatprep.subr.bf16.mxu0 0
      %1065 = vmatpush1.bf16.msra.mxu0 %v926
      %1066 = vmatprep.subr.bf16.mxu0 0
      %1067 = vmatpush1.bf16.msra.mxu0 %v925
      %1068 = vmatprep.subr.bf16.mxu0 0
      %1069 = vmatpush1.bf16.msra.mxu0 %v924
      %1070 = vmatprep.subr.bf16.mxu0 0
      %1071 = vmatpush1.bf16.msra.mxu0 %v923
      %1072 = vmatprep.subr.bf16.mxu0 0
      %1073 = vmatpush1.bf16.msra.mxu0 %v922
      %1074 = vmatprep.subr.bf16.mxu0 0
      %1075 = vmatpush1.bf16.msra.mxu0 %v921
      %1076 = vmatprep.subr.bf16.mxu0 0
      %1077 = vmatpush1.bf16.msra.mxu0 %v920
      %1078 = vmatprep.subr.bf16.mxu0 0
      %1079 = vmatpush1.bf16.msra.mxu0 %v919
      %1080 = vmatprep.subr.bf16.mxu0 0
      %1081 = vmatpush2.bf16.msra.mxu0 %v934
      %1082 = vmatprep.subr.bf16.mxu0 0
      %1083 = vmatpush2.bf16.msra.mxu0 %v933
      %1084 = vmatprep.subr.bf16.mxu0 0
      %1085 = vmatpush2.bf16.msra.mxu0 %v932
      %1086 = vmatprep.subr.bf16.mxu0 0
      %1087 = vmatpush2.bf16.msra.mxu0 %v931
      %1088 = vmatprep.subr.bf16.mxu0 0
      %1089 = vmatpush2.bf16.msra.mxu0 %v930
      %1090 = vmatprep.subr.bf16.mxu0 0
      %1091 = vmatpush2.bf16.msra.mxu0 %v929
      %1092 = vmatprep.subr.bf16.mxu0 0
      %1093 = vmatpush2.bf16.msra.mxu0 %v928
      %1094 = vmatprep.subr.bf16.mxu0 0
      %1095 = vmatpush2.bf16.msra.mxu0 %v927
      %1096 = vmatprep.mubr.bf16.mxu0 %v746
      %1097 = vmatmul.mubr.bf16.gmra.mxu0 %v745
      %v1098 = vpop.f32.mrf.mxu0
      %v1099 = vadd.f32 %v1002, %v1098
      %v1100 = vpop.f32.mrf.mxu0
      %v1101 = vpop.f32.mrf.mxu0
      %v1102 = vadd.f32 %v1005, %v1101
      %v1103 = vpop.f32.mrf.mxu0
      %1104 = vmatprep.mubr.bf16.mxu0 %v750
      %1105 = vmatmul.mubr.bf16.gmra.mxu0 %v749
      %v1106 = vpop.f32.mrf.mxu0
      %v1107 = vadd.f32 %v1010, %v1106
      %v1108 = vpop.f32.mrf.mxu0
      %v1109 = vpop.f32.mrf.mxu0
      %v1110 = vadd.f32 %v1013, %v1109
      %v1111 = vpop.f32.mrf.mxu0
      %1112 = vmatprep.mubr.bf16.mxu0 %v754
      %1113 = vmatmul.mubr.bf16.gmra.mxu0 %v753
      %v1114 = vpop.f32.mrf.mxu0
      %v1115 = vadd.f32 %v1018, %v1114
      %v1116 = vpop.f32.mrf.mxu0
      %v1117 = vpop.f32.mrf.mxu0
      %v1118 = vadd.f32 %v1021, %v1117
      %v1119 = vpop.f32.mrf.mxu0
      %1120 = vmatprep.mubr.bf16.mxu0 %v758
      %1121 = vmatmul.mubr.bf16.gmra.mxu0 %v757
      %v1122 = vpop.f32.mrf.mxu0
      %v1123 = vadd.f32 %v1026, %v1122
      %v1124 = vpop.f32.mrf.mxu0
      %v1125 = vpop.f32.mrf.mxu0
      %v1126 = vadd.f32 %v1029, %v1125
      %v1127 = vpop.f32.mrf.mxu0
      %1128 = vmatprep.mubr.bf16.mxu0 %v762
      %1129 = vmatmul.mubr.bf16.gmra.mxu0 %v761
      %v1130 = vpop.f32.mrf.mxu0
      %v1131 = vadd.f32 %v1034, %v1130
      %v1132 = vpop.f32.mrf.mxu0
      %v1133 = vpop.f32.mrf.mxu0
      %v1134 = vadd.f32 %v1037, %v1133
      %v1135 = vpop.f32.mrf.mxu0
      %1136 = vmatprep.mubr.bf16.mxu0 %v766
      %1137 = vmatmul.mubr.bf16.gmra.mxu0 %v765
      %v1138 = vpop.f32.mrf.mxu0
      %v1139 = vadd.f32 %v1042, %v1138
      %v1140 = vpop.f32.mrf.mxu0
      %v1141 = vpop.f32.mrf.mxu0
      %v1142 = vadd.f32 %v1045, %v1141
      %v1143 = vpop.f32.mrf.mxu0
      %1144 = vmatprep.mubr.bf16.mxu0 %v770
      %1145 = vmatmul.mubr.bf16.gmra.mxu0 %v769
      %v1146 = vpop.f32.mrf.mxu0
      %v1147 = vadd.f32 %v1050, %v1146
      %v1148 = vpop.f32.mrf.mxu0
      %v1149 = vpop.f32.mrf.mxu0
      %v1150 = vadd.f32 %v1053, %v1149
      %v1151 = vpop.f32.mrf.mxu0
      %1152 = vmatprep.mubr.bf16.mxu0 %v774
      %1153 = vmatmul.mubr.bf16.gmra.mxu0 %v773
      %v1154 = vpop.f32.mrf.mxu0
      %v1155 = vadd.f32 %v1058, %v1154
      %v1156 = vpop.f32.mrf.mxu0
      %v1157 = vpop.f32.mrf.mxu0
      %v1158 = vadd.f32 %v1061, %v1157
      %v1159 = vpop.f32.mrf.mxu0
      %1160 = vdwg.mxu0
      %s1161 = sld [smem:[#allocation5 + %s28]]
      %p1162 = scmp.eq.s32.totalorder %s1161, 1
      // Predicated region
      $region45: #{gcn_conv.3} parent=39 // pred_check
        %p1163 = pneg %p1162
      $region46: #{gcn_conv.3} parent=39 // pred_check_branch
        %1165 = sbr.rel (%p1163) target = $region48
      $region47: #{gcn_conv.3} parent=39 // pred_region
        %v1166 = vld [vmem:[%s291] sm:$0xff]
        %v1167 = vld [vmem:[%s291 + $0x8] sm:$0xff]
        %v1168 = vld [vmem:[%s291 + $0x10] sm:$0xff]
        %v1169 = vld [vmem:[%s291 + $0x18] sm:$0xff]
        %v1170 = vld [vmem:[%s291 + $0x20] sm:$0xff]
        %v1171 = vld [vmem:[%s291 + $0x28] sm:$0xff]
        %v1172 = vld [vmem:[%s291 + $0x30] sm:$0xff]
        %v1173 = vld [vmem:[%s291 + $0x38] sm:$0xff]
        %v1174 = vld [vmem:[%s291 + $0x40] sm:$0xff]
        %v1175 = vld [vmem:[%s291 + $0x48] sm:$0xff]
        %v1176 = vld [vmem:[%s291 + $0x50] sm:$0xff]
        %v1177 = vld [vmem:[%s291 + $0x58] sm:$0xff]
        %v1178 = vld [vmem:[%s291 + $0x60] sm:$0xff]
        %v1179 = vld [vmem:[%s291 + $0x68] sm:$0xff]
        %v1180 = vld [vmem:[%s291 + $0x70] sm:$0xff]
        %v1181 = vld [vmem:[%s291 + $0x78] sm:$0xff]
        %v1182 = vld [vmem:[%s3] sm:$0x1]
        %v1184 = vlaneseq
        %v1185 = vshrl.u32 %v1184, 7
        %v1186 = vsub.s32 0, %v1185
        %v1187 = vrot.slane %v1182, %v1186
        %v1189 = vadd.f32 %v1166, %v1187
        %v1190 = vadd.f32 %v1167, %v1187
        %v1191 = vadd.f32 %v1168, %v1187
        %v1192 = vadd.f32 %v1169, %v1187
        %v1193 = vadd.f32 %v1170, %v1187
        %v1194 = vadd.f32 %v1171, %v1187
        %v1195 = vadd.f32 %v1172, %v1187
        %v1196 = vadd.f32 %v1173, %v1187
        %v1197 = vadd.f32 %v1174, %v1187
        %v1198 = vadd.f32 %v1175, %v1187
        %v1199 = vadd.f32 %v1176, %v1187
        %v1200 = vadd.f32 %v1177, %v1187
        %v1201 = vadd.f32 %v1178, %v1187
        %v1202 = vadd.f32 %v1179, %v1187
        %v1203 = vadd.f32 %v1180, %v1187
        %v1204 = vadd.f32 %v1181, %v1187
        %v1205 = vmax.f32 %v1189, 0.0
        %v1206 = vmax.f32 %v1190, 0.0
        %v1207 = vmax.f32 %v1191, 0.0
        %v1208 = vmax.f32 %v1192, 0.0
        %v1209 = vmax.f32 %v1193, 0.0
        %v1210 = vmax.f32 %v1194, 0.0
        %v1211 = vmax.f32 %v1195, 0.0
        %v1212 = vmax.f32 %v1196, 0.0
        %v1213 = vmax.f32 %v1197, 0.0
        %v1214 = vmax.f32 %v1198, 0.0
        %v1215 = vmax.f32 %v1199, 0.0
        %v1216 = vmax.f32 %v1200, 0.0
        %v1217 = vmax.f32 %v1201, 0.0
        %v1218 = vmax.f32 %v1202, 0.0
        %v1219 = vmax.f32 %v1203, 0.0
        %v1220 = vmax.f32 %v1204, 0.0
        %v1221 = vld [vmem:[%s299] sm:$0xff]
        %v1222 = vld [vmem:[%s299 + $0x8] sm:$0xff]
        %v1223 = vld [vmem:[%s299 + $0x10] sm:$0xff]
        %v1224 = vld [vmem:[%s299 + $0x18] sm:$0xff]
        %v1225 = vld [vmem:[%s299 + $0x20] sm:$0xff]
        %v1226 = vld [vmem:[%s299 + $0x28] sm:$0xff]
        %v1227 = vld [vmem:[%s299 + $0x30] sm:$0xff]
        %v1228 = vld [vmem:[%s299 + $0x38] sm:$0xff]
        %v1229 = vld [vmem:[%s299 + $0x40] sm:$0xff]
        %v1230 = vld [vmem:[%s299 + $0x48] sm:$0xff]
        %v1231 = vld [vmem:[%s299 + $0x50] sm:$0xff]
        %v1232 = vld [vmem:[%s299 + $0x58] sm:$0xff]
        %v1233 = vld [vmem:[%s299 + $0x60] sm:$0xff]
        %v1234 = vld [vmem:[%s299 + $0x68] sm:$0xff]
        %v1235 = vld [vmem:[%s299 + $0x70] sm:$0xff]
        %v1236 = vld [vmem:[%s299 + $0x78] sm:$0xff]
        %1238 = vset.pattern.permute.xlu0 0
        %1239 = vperm.xlu0 %1238, %v1221
        %v1240 = vpop.permute.xlu0 %1239
        %1243 = vset.pattern.permute.xlu0 0
        %1244 = vperm.xlu0 %1243, %v1222
        %v1245 = vpop.permute.xlu0 %1244
        %1248 = vset.pattern.permute.xlu0 0
        %1249 = vperm.xlu0 %1248, %v1223
        %v1250 = vpop.permute.xlu0 %1249
        %1253 = vset.pattern.permute.xlu0 0
        %1254 = vperm.xlu0 %1253, %v1224
        %v1255 = vpop.permute.xlu0 %1254
        %1258 = vset.pattern.permute.xlu0 0
        %1259 = vperm.xlu0 %1258, %v1225
        %v1260 = vpop.permute.xlu0 %1259
        %1263 = vset.pattern.permute.xlu0 0
        %1264 = vperm.xlu0 %1263, %v1226
        %v1265 = vpop.permute.xlu0 %1264
        %1268 = vset.pattern.permute.xlu0 0
        %1269 = vperm.xlu0 %1268, %v1227
        %v1270 = vpop.permute.xlu0 %1269
        %1273 = vset.pattern.permute.xlu0 0
        %1274 = vperm.xlu0 %1273, %v1228
        %v1275 = vpop.permute.xlu0 %1274
        %1278 = vset.pattern.permute.xlu0 0
        %1279 = vperm.xlu0 %1278, %v1229
        %v1280 = vpop.permute.xlu0 %1279
        %1283 = vset.pattern.permute.xlu0 0
        %1284 = vperm.xlu0 %1283, %v1230
        %v1285 = vpop.permute.xlu0 %1284
        %1288 = vset.pattern.permute.xlu0 0
        %1289 = vperm.xlu0 %1288, %v1231
        %v1290 = vpop.permute.xlu0 %1289
        %1293 = vset.pattern.permute.xlu0 0
        %1294 = vperm.xlu0 %1293, %v1232
        %v1295 = vpop.permute.xlu0 %1294
        %1298 = vset.pattern.permute.xlu0 0
        %1299 = vperm.xlu0 %1298, %v1233
        %v1300 = vpop.permute.xlu0 %1299
        %1303 = vset.pattern.permute.xlu0 0
        %1304 = vperm.xlu0 %1303, %v1234
        %v1305 = vpop.permute.xlu0 %1304
        %1308 = vset.pattern.permute.xlu0 0
        %1309 = vperm.xlu0 %1308, %v1235
        %v1310 = vpop.permute.xlu0 %1309
        %1313 = vset.pattern.permute.xlu0 0
        %1314 = vperm.xlu0 %1313, %v1236
        %v1315 = vpop.permute.xlu0 %1314
        %v1317 = vmul.f32 %v1205, %v1240
        %v1318 = vmul.f32 %v1206, %v1245
        %v1319 = vmul.f32 %v1207, %v1250
        %v1320 = vmul.f32 %v1208, %v1255
        %v1321 = vmul.f32 %v1209, %v1260
        %v1322 = vmul.f32 %v1210, %v1265
        %v1323 = vmul.f32 %v1211, %v1270
        %v1324 = vmul.f32 %v1212, %v1275
        %v1325 = vmul.f32 %v1213, %v1280
        %v1326 = vmul.f32 %v1214, %v1285
        %v1327 = vmul.f32 %v1215, %v1290
        %v1328 = vmul.f32 %v1216, %v1295
        %v1329 = vmul.f32 %v1217, %v1300
        %v1330 = vmul.f32 %v1218, %v1305
        %v1331 = vmul.f32 %v1219, %v1310
        %v1332 = vmul.f32 %v1220, %v1315
        %1333 = vst [vmem:[%s317] sm:$0xff] %v1317
        %1334 = vst [vmem:[%s317 + $0x8] sm:$0xff] %v1318
        %1335 = vst [vmem:[%s317 + $0x10] sm:$0xff] %v1319
        %1336 = vst [vmem:[%s317 + $0x18] sm:$0xff] %v1320
        %1337 = vst [vmem:[%s317 + $0x20] sm:$0xff] %v1321
        %1338 = vst [vmem:[%s317 + $0x28] sm:$0xff] %v1322
        %1339 = vst [vmem:[%s317 + $0x30] sm:$0xff] %v1323
        %1340 = vst [vmem:[%s317 + $0x38] sm:$0xff] %v1324
        %1341 = vst [vmem:[%s317 + $0x40] sm:$0xff] %v1325
        %1342 = vst [vmem:[%s317 + $0x48] sm:$0xff] %v1326
        %1343 = vst [vmem:[%s317 + $0x50] sm:$0xff] %v1327
        %1344 = vst [vmem:[%s317 + $0x58] sm:$0xff] %v1328
        %1345 = vst [vmem:[%s317 + $0x60] sm:$0xff] %v1329
        %1346 = vst [vmem:[%s317 + $0x68] sm:$0xff] %v1330
        %1347 = vst [vmem:[%s317 + $0x70] sm:$0xff] %v1331
        %1348 = vst [vmem:[%s317 + $0x78] sm:$0xff] %v1332
      $region48: #{gcn_conv.3} parent=39 // pred_fallthru
        _
      %v1349 = vld [vmem:[%s317] sm:$0xff]
      %v1350 = vld [vmem:[%s317 + $0x8] sm:$0xff]
      %v1351 = vld [vmem:[%s317 + $0x10] sm:$0xff]
      %v1352 = vld [vmem:[%s317 + $0x18] sm:$0xff]
      %v1353 = vld [vmem:[%s317 + $0x20] sm:$0xff]
      %v1354 = vld [vmem:[%s317 + $0x28] sm:$0xff]
      %v1355 = vld [vmem:[%s317 + $0x30] sm:$0xff]
      %v1356 = vld [vmem:[%s317 + $0x38] sm:$0xff]
      %v1357 = vld [vmem:[%s317 + $0x40] sm:$0xff]
      %v1358 = vld [vmem:[%s317 + $0x48] sm:$0xff]
      %v1359 = vld [vmem:[%s317 + $0x50] sm:$0xff]
      %v1360 = vld [vmem:[%s317 + $0x58] sm:$0xff]
      %v1361 = vld [vmem:[%s317 + $0x60] sm:$0xff]
      %v1362 = vld [vmem:[%s317 + $0x68] sm:$0xff]
      %v1363 = vld [vmem:[%s317 + $0x70] sm:$0xff]
      %v1364 = vld [vmem:[%s317 + $0x78] sm:$0xff]
      %v1365 = vadd.f32 %v1349, %v1099
      %v1366 = vadd.f32 %v1350, %v1102
      %v1367 = vadd.f32 %v1351, %v1107
      %v1368 = vadd.f32 %v1352, %v1110
      %v1369 = vadd.f32 %v1353, %v1115
      %v1370 = vadd.f32 %v1354, %v1118
      %v1371 = vadd.f32 %v1355, %v1123
      %v1372 = vadd.f32 %v1356, %v1126
      %v1373 = vadd.f32 %v1357, %v1131
      %v1374 = vadd.f32 %v1358, %v1134
      %v1375 = vadd.f32 %v1359, %v1139
      %v1376 = vadd.f32 %v1360, %v1142
      %v1377 = vadd.f32 %v1361, %v1147
      %v1378 = vadd.f32 %v1362, %v1150
      %v1379 = vadd.f32 %v1363, %v1155
      %v1380 = vadd.f32 %v1364, %v1158
      %1381 = vst [vmem:[%s317] sm:$0xff] %v1365
      %1382 = vst [vmem:[%s317 + $0x8] sm:$0xff] %v1366
      %1383 = vst [vmem:[%s317 + $0x10] sm:$0xff] %v1367
      %1384 = vst [vmem:[%s317 + $0x18] sm:$0xff] %v1368
      %1385 = vst [vmem:[%s317 + $0x20] sm:$0xff] %v1369
      %1386 = vst [vmem:[%s317 + $0x28] sm:$0xff] %v1370
      %1387 = vst [vmem:[%s317 + $0x30] sm:$0xff] %v1371
      %1388 = vst [vmem:[%s317 + $0x38] sm:$0xff] %v1372
      %1389 = vst [vmem:[%s317 + $0x40] sm:$0xff] %v1373
      %1390 = vst [vmem:[%s317 + $0x48] sm:$0xff] %v1374
      %1391 = vst [vmem:[%s317 + $0x50] sm:$0xff] %v1375
      %1392 = vst [vmem:[%s317 + $0x58] sm:$0xff] %v1376
      %1393 = vst [vmem:[%s317 + $0x60] sm:$0xff] %v1377
      %1394 = vst [vmem:[%s317 + $0x68] sm:$0xff] %v1378
      %1395 = vst [vmem:[%s317 + $0x70] sm:$0xff] %v1379
      %1396 = vst [vmem:[%s317 + $0x78] sm:$0xff] %v1380
      %s1397 = sld [smem:[#allocation4 + %s28]]
      %s1398 = smul.u32 16, %s1397
      %p1399 = scmp.lt.s32.totalorder %s1398, 63
      %s1400 = scalar_select %p1399, %s1398, 63
      %s1401 = smul.addr %s1400, 8
      %s1402 = scalar_lea.vmem %s7, %s1401
      // Predicated region
      $region49: #{gcn_conv.3} parent=39 // pred_check
        %p1403 = pneg %p177
      $region50: #{gcn_conv.3} parent=39 // pred_check_branch
        %1405 = sbr.rel (%p1403) target = $region52
      $region51: #{gcn_conv.3} parent=39 // pred_region
        %s1406 = sld [smem:[#allocation4 + %s28]]
        %s1407 = smul.u32 16, %s1406
      $region52: #{gcn_conv.3} parent=39 // pred_fallthru
        _
    $region40: #{gcn_conv.3} parent=5 // pred_fallthru
      _
    %p1408 = scmp.le.s32.totalorder 2, %s23
    // Predicated region
    $region53: #{gcn_conv.3} parent=5 // pred_check
      %p1409 = pneg %p1408
    $region54: #{gcn_conv.3} parent=5 // pred_check_branch
      %1411 = sbr.rel (%p1409) target = $region56
    $region55: #{gcn_conv.3} parent=5 // pred_region
      %s1412 = ssub.s32 %s23, 2
      // Predicated region
      $region57: #{gcn_conv.3} parent=55 // pred_check
        %p1413 = pneg %p183
      $region58: #{gcn_conv.3} parent=55 // pred_check_branch
        %1415 = sbr.rel (%p1413) target = $region60
      $region59: #{gcn_conv.3} parent=55 // pred_region
        %s1416 = sld [smem:[#allocation4 + %s29]]
        %s1417 = smul.u32 16, %s1416
        %p1418 = scmp.lt.s32.totalorder %s1417, 63
        %s1419 = scalar_select %p1418, %s1417, 63
        %s1420 = smul.addr %s1419, 8
        %s1421 = scalar_lea.vmem %s7, %s1420
      $region60: #{gcn_conv.3} parent=55 // pred_fallthru
        _
    $region56: #{gcn_conv.3} parent=5 // pred_fallthru
      _
  $region6: #{gcn_conv.3} parent=0 // loop_footer
    %s27 = sadd.s32 1, %s23
  $region7: #{gcn_conv.3} parent=0 // loop_footer_branch
    %22 = sbr.rel target = $region3
  $region8: #{gcn_conv.3} parent=0 // loop_exit
    _

</llo_original>
